<compile_context>
chip_gen: v7x
topology: tpu7x:2x2x1
jax: 0.10.0
libtpu: 0.0.40
codegen_flags: <defaults>
</compile_context>

<pallas_src>
import jax
import jax.numpy as jnp
from jax.experimental import pallas as pl
from jax.experimental.pallas import tpu as pltpu

# ---- "ModelConfig" / predictor hyper-parameters (deterministic, in-script) --
F0_LOSS_WEIGHT = 1.0
VOWEL_VOCAB = 40
CONSONANT_VOCAB = 40
NUM_SPEAKERS = 4
PHONEME_EMB = 16
SPEAKER_EMB = 8
HIDDEN = 32
FEATURE_DIM = 2 * PHONEME_EMB + 4 + 1 + SPEAKER_EMB  # 45

# Packed-input row layout (built in the wrapper).
#   int_feats [B, 6, L]: 0=vowel, 1=cons, 2=start_acc, 3=end_acc, 4=start_ap, 5=end_ap
#   f32_feats [B, 4, L]: 0=f0 (loss target), 1=f0 rolled by 1, 2=voiced, 3=padded
_N_INT_ROWS = 6
_N_F32_ROWS = 4


# ----------------------------- Pallas kernel ---------------------------------
def _fused_model_kernel(
        # scalar-prefetch (SMEM)
        spk_id_ref,
        # packed per-timestep inputs, one batch row per grid step
        int_ref,                # view [6, L] int32
        f32_ref,                # view [4, L] float32
        # resident parameters (whole arrays in VMEM)
        vembT_ref, cembT_ref, sembT_ref,
        w1v_ref, w1c_ref, w1a_ref, w1f_ref, w1s_ref, b1_ref,
        w2_ref, b2_ref,
        # outputs
        loss_ref, f0_out_ref,
        # VMEM scratch (persists across grid steps)
        mv_sc, mc_sc, ms_sc, acc_s_ref, acc_c_ref):
    b = pl.program_id(0)
    nb = pl.num_programs(0)
    L = int_ref.shape[1]
    f32 = jnp.float32

    # ---- step 0: fold W1 blocks into the embedding tables, zero accumulators.
    # mv[h, v] = (w1_v @ vowel_emb[v])_h, so the per-token gather+linear becomes
    # a single one-hot matmul against a precomputed [H, vocab] matrix.
    @pl.when(b == 0)
    def _init():
        mv_sc[...] = jnp.dot(w1v_ref[...], vembT_ref[...],
                             preferred_element_type=f32)      # [H, Vv]
        mc_sc[...] = jnp.dot(w1c_ref[...], cembT_ref[...],
                             preferred_element_type=f32)      # [H, Vc]
        ms_sc[...] = jnp.dot(w1s_ref[...], sembT_ref[...],
                             preferred_element_type=f32)      # [H, S]
        acc_s_ref[...] = jnp.zeros_like(acc_s_ref)
        acc_c_ref[...] = jnp.zeros_like(acc_c_ref)

    ints = int_ref[...]                                       # [6, L] int32
    vowel_id = ints[0:1, :]                                   # [1, L]
    cons_id = ints[1:2, :]                                    # [1, L] (-1 => none)
    accent = ints[2:6, :].astype(f32)                         # [4, L]

    fvals = f32_ref[...]                                      # [4, L] f32
    f0_row = fvals[0:1, :]                                    # loss target
    f0_in = fvals[1:2, :]                                     # rolled feature
    voiced = fvals[2:3, :]
    padded = fvals[3:4, :]

    # ---- phoneme embedding gathers as one-hot matmuls (MXU) ------------------
    iota_v = jax.lax.broadcasted_iota(jnp.int32, (VOWEL_VOCAB, L), 0)
    iota_c = jax.lax.broadcasted_iota(jnp.int32, (CONSONANT_VOCAB, L), 0)
    oneh_v = (iota_v == vowel_id).astype(f32)                 # [Vv, L]
    oneh_c = (iota_c == cons_id).astype(f32)                  # [Vc, L]; -1 -> 0 col

    h = jnp.dot(mv_sc[...], oneh_v, preferred_element_type=f32)      # [H, L]
    h = h + jnp.dot(mc_sc[...], oneh_c, preferred_element_type=f32)

    # ---- accent flags: one skinny MXU matmul ---------------------------------
    h = h + jnp.dot(w1a_ref[...], accent, preferred_element_type=f32)  # [H,4]x[4,L]

    # ---- rolled f0 feature (roll done in wrapper, fused into the stack) ------
    h = h + w1f_ref[...] * f0_in                              # [H,1]*[1,L] -> [H,L]

    # ---- speaker embedding via scalar-prefetched id (SMEM) -------------------
    sid = spk_id_ref[b]
    oneh_s = (jax.lax.broadcasted_iota(jnp.int32, (1, NUM_SPEAKERS), 1)
              == sid).astype(f32)                             # [1, S]
    h = h + jnp.sum(ms_sc[...] * oneh_s, axis=1, keepdims=True)   # [H, 1]

    # ---- MLP: bias + ReLU; 2nd (32x1) matmul as VPU mul + sublane reduce -----
    h = jnp.maximum(h + b1_ref[...], 0.0)                     # [H, L]
    pred = jnp.sum(w2_ref[...] * h, axis=0, keepdims=True) + b2_ref[...]  # [1, L]
    f0_out_ref[...] = pred                                    # lane-dense block

    # ---- masked L1 loss, accumulated across batch steps ----------------------
    mask = voiced * (1.0 - padded)
    diff = jnp.abs(pred - f0_row) * mask
    acc_s_ref[...] += jnp.sum(diff, keepdims=True)
    acc_c_ref[...] += jnp.sum(mask, keepdims=True)

    @pl.when(b == nb - 1)
    def _finalize():
        loss_ref[...] = (acc_s_ref[...] / acc_c_ref[...]) * F0_LOSS_WEIGHT


def _fused_forward(speaker_id, int_feats, f32_feats, params):
    B = int_feats.shape[0]
    L = int_feats.shape[2]

    param_order = ("vowel_emb_t", "cons_emb_t", "spk_emb_t",
                   "w1_v", "w1_c", "w1_a", "w1_f", "w1_s", "b1", "w2", "b2")

    in_specs = [
        pl.BlockSpec((None, _N_INT_ROWS, L), lambda b, spk: (b, 0, 0)),
        pl.BlockSpec((None, _N_F32_ROWS, L), lambda b, spk: (b, 0, 0)),
    ] + [pl.BlockSpec(params[k].shape, lambda b, spk: (0, 0)) for k in param_order]

    grid_spec = pltpu.PrefetchScalarGridSpec(
        num_scalar_prefetch=1,
        grid=(B,),
        in_specs=in_specs,
        out_specs=[pl.BlockSpec((1, 1), lambda b, spk: (0, 0)),
                   pl.BlockSpec((None, 1, L), lambda b, spk: (b, 0, 0))],
        scratch_shapes=[pltpu.VMEM((HIDDEN, VOWEL_VOCAB), jnp.float32),
                        pltpu.VMEM((HIDDEN, CONSONANT_VOCAB), jnp.float32),
                        pltpu.VMEM((HIDDEN, NUM_SPEAKERS), jnp.float32),
                        pltpu.VMEM((1, 1), jnp.float32),
                        pltpu.VMEM((1, 1), jnp.float32)],
    )

    loss_arr, f0_out = pl.pallas_call(
        _fused_model_kernel,
        grid_spec=grid_spec,
        out_shape=(jax.ShapeDtypeStruct((1, 1), jnp.float32),
                   jax.ShapeDtypeStruct((B, 1, L), jnp.float32)),
        compiler_params=pltpu.CompilerParams(
            dimension_semantics=("arbitrary",)),   # loss reduces over batch axis
    )(speaker_id, int_feats, f32_feats, *[params[k] for k in param_order])
    return loss_arr, f0_out


# ------------------------------- glue (JAX) ----------------------------------
def init_params(key):
    ks = jax.random.split(key, 5)
    w1 = 0.1 * jax.random.normal(ks[3], (HIDDEN, FEATURE_DIM), jnp.float32)
    e0 = 2 * PHONEME_EMB
    return dict(
        # embedding tables stored transposed ([emb, vocab]) so the kernel's
        # one-hot gathers / weight folds are plain (non-transposed) MXU matmuls.
        vowel_emb_t=0.1 * jax.random.normal(ks[0], (PHONEME_EMB, VOWEL_VOCAB), jnp.float32),
        cons_emb_t=0.1 * jax.random.normal(ks[1], (PHONEME_EMB, CONSONANT_VOCAB), jnp.float32),
        spk_emb_t=0.1 * jax.random.normal(ks[2], (SPEAKER_EMB, NUM_SPEAKERS), jnp.float32),
        # first linear stored PyTorch-style [H, D], pre-split per feature group
        # so the kernel never concatenates along lanes.
        w1_v=w1[:, 0:PHONEME_EMB],
        w1_c=w1[:, PHONEME_EMB:e0],
        w1_a=w1[:, e0:e0 + 4],
        w1_f=w1[:, e0 + 4:e0 + 5],
        w1_s=w1[:, e0 + 5:FEATURE_DIM],
        b1=jnp.zeros((HIDDEN, 1), jnp.float32),
        w2=0.1 * jax.random.normal(ks[4], (HIDDEN, 1), jnp.float32),
        b2=jnp.zeros((1, 1), jnp.float32),
    )


def model_forward(params, vowel, cons, sa, ea, sap, eap, f0, voiced, padded, speaker_id):
    B, L = f0.shape
    f32 = jnp.float32
    # Pack the 9 per-timestep streams into 2 arrays (fewer, denser DMAs).
    int_feats = jnp.stack(
        [vowel, cons, sa, ea, sap, eap], axis=1).astype(jnp.int32)          # [B,6,L]
    f0f = f0.astype(f32)
    f32_feats = jnp.stack(
        [f0f, jnp.roll(f0f, 1, axis=1),                                      # roll from spec
         voiced.astype(f32), padded.astype(f32)], axis=1)                    # [B,4,L]

    loss_arr, f0_out = _fused_forward(
        speaker_id.astype(jnp.int32), int_feats, f32_feats, params)
    loss = loss_arr[0, 0]
    # TODO(synk): report(values, self) training-framework logging hook and the
    # eval-mode (loss, weight) packing have no Pallas/JAX equivalent; omitted.
    return loss, f0_out.reshape(B, L)


def model_forward_ref(params, vowel, cons, sa, ea, sap, eap, f0, voiced, padded, speaker_id):
    B, L = f0.shape
    f32 = jnp.float32
    f0_in = jnp.roll(f0, 1, axis=1)
    ve = params["vowel_emb_t"].T[vowel]                                 # [B, L, E]
    has_c = (cons >= 0)[..., None].astype(f32)
    ce = params["cons_emb_t"].T[jnp.maximum(cons, 0)] * has_c           # [B, L, E]
    se = jnp.broadcast_to(params["spk_emb_t"].T[speaker_id][:, None, :],
                          (B, L, SPEAKER_EMB))
    x = jnp.concatenate([
        ve, ce,
        sa[..., None].astype(f32), ea[..., None].astype(f32),
        sap[..., None].astype(f32), eap[..., None].astype(f32),
        f0_in[..., None].astype(f32), se], axis=-1).reshape(B * L, FEATURE_DIM)
    w1 = jnp.concatenate([params["w1_v"], params["w1_c"], params["w1_a"],
                          params["w1_f"], params["w1_s"]], axis=1)      # [H, D]
    h = jnp.maximum(x @ w1.T + params["b1"].T, 0.0)
    pred = h @ params["w2"] + params["b2"]                              # [N, 1]
    mask = jnp.logical_and(voiced, jnp.logical_not(padded)).astype(f32).reshape(B * L, 1)
    loss = (jnp.sum(jnp.abs(pred - f0.reshape(B * L, 1)) * mask)
            / jnp.sum(mask)) * F0_LOSS_WEIGHT
    return loss, pred.reshape(B, L)


# --------------------------------- main ---------------------------------------
if __name__ == "__main__":
    key = jax.random.PRNGKey(0)
    kp, k1, k2, k3, k4, k5, k6, k7, k8, k9 = jax.random.split(key, 10)

    B, L = 2, 8
    params = init_params(kp)

    vowel = jax.random.randint(k1, (B, L), 0, VOWEL_VOCAB, jnp.int32)
    cons = jax.random.randint(k2, (B, L), -1, CONSONANT_VOCAB, jnp.int32)
    sa = jax.random.randint(k3, (B, L), 0, 2, jnp.int32)
    ea = jax.random.randint(k4, (B, L), 0, 2, jnp.int32)
    sap = jax.random.randint(k5, (B, L), 0, 2, jnp.int32)
    eap = jax.random.randint(k6, (B, L), 0, 2, jnp.int32)
    f0 = jax.random.uniform(k7, (B, L), jnp.float32, 4.0, 6.0)
    voiced = jax.random.bernoulli(k8, 0.8, (B, L)).at[:, 0].set(True)
    padded = jnp.zeros((B, L), bool).at[:, L - 2:].set(True)
    speaker_id = jax.random.randint(k9, (B,), 0, NUM_SPEAKERS, jnp.int32)

    fwd = jax.jit(model_forward)
    loss, out_f0 = fwd(params, vowel, cons, sa, ea, sap, eap,
                       f0, voiced, padded, speaker_id)
    jax.block_until_ready((loss, out_f0))

    loss_ref, out_ref = model_forward_ref(params, vowel, cons, sa, ea, sap, eap,
                                          f0, voiced, padded, speaker_id)
    assert jnp.allclose(out_f0, out_ref, rtol=1e-4, atol=1e-4), "predictor mismatch"
    assert jnp.allclose(loss, loss_ref, rtol=1e-4, atol=1e-4), "loss mismatch"

    print("KERNEL_OK")
</pallas_src>

<mosaic_0001>
module attributes {stable_mosaic.version = 11 : i64} {
  func.func @_fused_model_kernel(%arg0: i32, %arg1: memref<2xi32, #tpu.memory_space<smem>>, %arg2: memref<1x6x8xi32, #tpu.memory_space<vmem>>, %arg3: memref<1x4x8xf32, #tpu.memory_space<vmem>>, %arg4: memref<16x40xf32, #tpu.memory_space<vmem>>, %arg5: memref<16x40xf32, #tpu.memory_space<vmem>>, %arg6: memref<8x4xf32, #tpu.memory_space<vmem>>, %arg7: memref<32x16xf32, #tpu.memory_space<vmem>>, %arg8: memref<32x16xf32, #tpu.memory_space<vmem>>, %arg9: memref<32x4xf32, #tpu.memory_space<vmem>>, %arg10: memref<32x1xf32, #tpu.memory_space<vmem>>, %arg11: memref<32x8xf32, #tpu.memory_space<vmem>>, %arg12: memref<32x1xf32, #tpu.memory_space<vmem>>, %arg13: memref<32x1xf32, #tpu.memory_space<vmem>>, %arg14: memref<1x1xf32, #tpu.memory_space<vmem>>, %arg15: memref<1x1xf32, #tpu.memory_space<vmem>>, %arg16: memref<1x1x8xf32, #tpu.memory_space<vmem>>, %arg17: memref<32x40xf32, #tpu.memory_space<vmem>>, %arg18: memref<32x40xf32, #tpu.memory_space<vmem>>, %arg19: memref<32x4xf32, #tpu.memory_space<vmem>>, %arg20: memref<1x1xf32, #tpu.memory_space<vmem>>, %arg21: memref<1x1xf32, #tpu.memory_space<vmem>>) attributes {dimension_semantics = [#tpu.dimension_semantics<arbitrary>], iteration_bounds = array<i64: 2>, scalar_prefetch = 1 : i64, scratch_operands = 5 : i64, tpu.core_type = #tpu.core_type<tc>, window_params = [{transform_indices = @transform_0, window_bounds = array<i64: 1, 6, 8>}, {transform_indices = @transform_1, window_bounds = array<i64: 1, 4, 8>}, {pipeline_mode = #tpu.pipeline_mode<synchronous>, transform_indices = @transform_2, window_bounds = array<i64: 16, 40>}, {pipeline_mode = #tpu.pipeline_mode<synchronous>, transform_indices = @transform_3, window_bounds = array<i64: 16, 40>}, {pipeline_mode = #tpu.pipeline_mode<synchronous>, transform_indices = @transform_4, window_bounds = array<i64: 8, 4>}, {pipeline_mode = #tpu.pipeline_mode<synchronous>, transform_indices = @transform_5, window_bounds = array<i64: 32, 16>}, {pipeline_mode = #tpu.pipeline_mode<synchronous>, transform_indices = @transform_6, window_bounds = array<i64: 32, 16>}, {pipeline_mode = #tpu.pipeline_mode<synchronous>, transform_indices = @transform_7, window_bounds = array<i64: 32, 4>}, {pipeline_mode = #tpu.pipeline_mode<synchronous>, transform_indices = @transform_8, window_bounds = array<i64: 32, 1>}, {pipeline_mode = #tpu.pipeline_mode<synchronous>, transform_indices = @transform_9, window_bounds = array<i64: 32, 8>}, {pipeline_mode = #tpu.pipeline_mode<synchronous>, transform_indices = @transform_10, window_bounds = array<i64: 32, 1>}, {pipeline_mode = #tpu.pipeline_mode<synchronous>, transform_indices = @transform_11, window_bounds = array<i64: 32, 1>}, {pipeline_mode = #tpu.pipeline_mode<synchronous>, transform_indices = @transform_12, window_bounds = array<i64: 1, 1>}, {pipeline_mode = #tpu.pipeline_mode<synchronous>, transform_indices = @transform_13, window_bounds = array<i64: 1, 1>}, {transform_indices = @transform_14, window_bounds = array<i64: 1, 1, 8>}]} {
    %c0_i32 = arith.constant 0 : i32
    %0 = arith.cmpi eq, %arg0, %c0_i32 : i32
    %1 = arith.extui %0 : i1 to i32
    %c0_i32_0 = arith.constant 0 : i32
    %2 = arith.cmpi ne, %1, %c0_i32_0 : i32
    scf.if %2 {
      %c0_42 = arith.constant 0 : index
      %c0_43 = arith.constant 0 : index
      %93 = vector.load %arg7[%c0_42, %c0_43] : memref<32x16xf32, #tpu.memory_space<vmem>>, vector<32x16xf32>
      %c0_44 = arith.constant 0 : index
      %c0_45 = arith.constant 0 : index
      %94 = vector.load %arg4[%c0_44, %c0_45] : memref<16x40xf32, #tpu.memory_space<vmem>>, vector<16x40xf32>
      %cst_46 = arith.constant dense<0.000000e+00> : vector<32x40xf32>
      %95 = tpu.matmul %93, %94, %cst_46 {dimension_numbers = #tpu.dot_dimension_numbers<[1], [0], [0], [1], [0, 0, 1, 1], [], []>} : vector<32x16xf32>, vector<16x40xf32>, vector<32x40xf32> -> vector<32x40xf32>
      %c0_47 = arith.constant 0 : index
      %c0_48 = arith.constant 0 : index
      %96 = vector.load %arg17[%c0_47, %c0_48] : memref<32x40xf32, #tpu.memory_space<vmem>>, vector<32x40xf32>
      tpu.vector_store %arg17[%c0_47, %c0_48], %95 {strides = array<i32>} : memref<32x40xf32, #tpu.memory_space<vmem>>, vector<32x40xf32>,
      %c0_49 = arith.constant 0 : index
      %c0_50 = arith.constant 0 : index
      %97 = vector.load %arg8[%c0_49, %c0_50] : memref<32x16xf32, #tpu.memory_space<vmem>>, vector<32x16xf32>
      %c0_51 = arith.constant 0 : index
      %c0_52 = arith.constant 0 : index
      %98 = vector.load %arg5[%c0_51, %c0_52] : memref<16x40xf32, #tpu.memory_space<vmem>>, vector<16x40xf32>
      %cst_53 = arith.constant dense<0.000000e+00> : vector<32x40xf32>
      %99 = tpu.matmul %97, %98, %cst_53 {dimension_numbers = #tpu.dot_dimension_numbers<[1], [0], [0], [1], [0, 0, 1, 1], [], []>} : vector<32x16xf32>, vector<16x40xf32>, vector<32x40xf32> -> vector<32x40xf32>
      %c0_54 = arith.constant 0 : index
      %c0_55 = arith.constant 0 : index
      %100 = vector.load %arg18[%c0_54, %c0_55] : memref<32x40xf32, #tpu.memory_space<vmem>>, vector<32x40xf32>
      tpu.vector_store %arg18[%c0_54, %c0_55], %99 {strides = array<i32>} : memref<32x40xf32, #tpu.memory_space<vmem>>, vector<32x40xf32>,
      %c0_56 = arith.constant 0 : index
      %c0_57 = arith.constant 0 : index
      %101 = vector.load %arg11[%c0_56, %c0_57] : memref<32x8xf32, #tpu.memory_space<vmem>>, vector<32x8xf32>
      %c0_58 = arith.constant 0 : index
      %c0_59 = arith.constant 0 : index
      %102 = vector.load %arg6[%c0_58, %c0_59] : memref<8x4xf32, #tpu.memory_space<vmem>>, vector<8x4xf32>
      %cst_60 = arith.constant dense<0.000000e+00> : vector<32x4xf32>
      %103 = tpu.matmul %101, %102, %cst_60 {dimension_numbers = #tpu.dot_dimension_numbers<[1], [0], [0], [1], [0, 0, 1, 1], [], []>} : vector<32x8xf32>, vector<8x4xf32>, vector<32x4xf32> -> vector<32x4xf32>
      %c0_61 = arith.constant 0 : index
      %c0_62 = arith.constant 0 : index
      %104 = vector.load %arg19[%c0_61, %c0_62] : memref<32x4xf32, #tpu.memory_space<vmem>>, vector<32x4xf32>
      tpu.vector_store %arg19[%c0_61, %c0_62], %103 {strides = array<i32>} : memref<32x4xf32, #tpu.memory_space<vmem>>, vector<32x4xf32>,
      %cst_63 = arith.constant 0.000000e+00 : f32
      %105 = vector.broadcast %cst_63 : f32 to vector<1x1xf32>
      %c0_64 = arith.constant 0 : index
      %c0_65 = arith.constant 0 : index
      %106 = vector.load %arg20[%c0_64, %c0_65] : memref<1x1xf32, #tpu.memory_space<vmem>>, vector<1x1xf32>
      tpu.vector_store %arg20[%c0_64, %c0_65], %105 {strides = array<i32>} : memref<1x1xf32, #tpu.memory_space<vmem>>, vector<1x1xf32>,
      %cst_66 = arith.constant 0.000000e+00 : f32
      %107 = vector.broadcast %cst_66 : f32 to vector<1x1xf32>
      %c0_67 = arith.constant 0 : index
      %c0_68 = arith.constant 0 : index
      %108 = vector.load %arg21[%c0_67, %c0_68] : memref<1x1xf32, #tpu.memory_space<vmem>>, vector<1x1xf32>
      tpu.vector_store %arg21[%c0_67, %c0_68], %107 {strides = array<i32>} : memref<1x1xf32, #tpu.memory_space<vmem>>, vector<1x1xf32>,
    } else {
    }
    %c0 = arith.constant 0 : index
    %c0_1 = arith.constant 0 : index
    %c0_2 = arith.constant 0 : index
    %3 = vector.load %arg2[%c0, %c0_1, %c0_2] : memref<1x6x8xi32, #tpu.memory_space<vmem>>, vector<1x6x8xi32>
    %4 = vector.shape_cast %3 : vector<1x6x8xi32> to vector<6x8xi32>
    %5 = vector.extract_strided_slice %4 {offsets = [0, 0], sizes = [1, 8], strides = [1, 1]} : vector<6x8xi32> to vector<1x8xi32>
    %6 = vector.extract_strided_slice %4 {offsets = [1, 0], sizes = [1, 8], strides = [1, 1]} : vector<6x8xi32> to vector<1x8xi32>
    %7 = vector.extract_strided_slice %4 {offsets = [2, 0], sizes = [4, 8], strides = [1, 1]} : vector<6x8xi32> to vector<4x8xi32>
    %8 = arith.sitofp %7 : vector<4x8xi32> to vector<4x8xf32>
    %c0_3 = arith.constant 0 : index
    %c0_4 = arith.constant 0 : index
    %c0_5 = arith.constant 0 : index
    %9 = vector.load %arg3[%c0_3, %c0_4, %c0_5] : memref<1x4x8xf32, #tpu.memory_space<vmem>>, vector<1x4x8xf32>
    %10 = vector.shape_cast %9 : vector<1x4x8xf32> to vector<4x8xf32>
    %11 = vector.extract_strided_slice %10 {offsets = [0, 0], sizes = [1, 8], strides = [1, 1]} : vector<4x8xf32> to vector<1x8xf32>
    %12 = vector.extract_strided_slice %10 {offsets = [1, 0], sizes = [1, 8], strides = [1, 1]} : vector<4x8xf32> to vector<1x8xf32>
    %13 = vector.extract_strided_slice %10 {offsets = [2, 0], sizes = [1, 8], strides = [1, 1]} : vector<4x8xf32> to vector<1x8xf32>
    %14 = vector.extract_strided_slice %10 {offsets = [3, 0], sizes = [1, 8], strides = [1, 1]} : vector<4x8xf32> to vector<1x8xf32>
    %15 = tpu.iota {dimensions = array<i32: 0>} : vector<40x8xi32>
    %16 = tpu.iota {dimensions = array<i32: 0>} : vector<40x8xi32>
    %17 = vector.broadcast %5 : vector<1x8xi32> to vector<40x8xi32>
    %18 = arith.cmpi eq, %15, %17 : vector<40x8xi32>
    %19 = arith.extui %18 : vector<40x8xi1> to vector<40x8xi32>
    %20 = arith.sitofp %19 : vector<40x8xi32> to vector<40x8xf32>
    %21 = vector.broadcast %6 : vector<1x8xi32> to vector<40x8xi32>
    %22 = arith.cmpi eq, %16, %21 : vector<40x8xi32>
    %23 = arith.extui %22 : vector<40x8xi1> to vector<40x8xi32>
    %24 = arith.sitofp %23 : vector<40x8xi32> to vector<40x8xf32>
    %c0_6 = arith.constant 0 : index
    %c0_7 = arith.constant 0 : index
    %25 = vector.load %arg17[%c0_6, %c0_7] : memref<32x40xf32, #tpu.memory_space<vmem>>, vector<32x40xf32>
    %cst = arith.constant dense<0.000000e+00> : vector<32x8xf32>
    %26 = tpu.matmul %25, %20, %cst {dimension_numbers = #tpu.dot_dimension_numbers<[1], [0], [0], [1], [0, 0, 1, 1], [], []>} : vector<32x40xf32>, vector<40x8xf32>, vector<32x8xf32> -> vector<32x8xf32>
    %c0_8 = arith.constant 0 : index
    %c0_9 = arith.constant 0 : index
    %27 = vector.load %arg18[%c0_8, %c0_9] : memref<32x40xf32, #tpu.memory_space<vmem>>, vector<32x40xf32>
    %cst_10 = arith.constant dense<0.000000e+00> : vector<32x8xf32>
    %28 = tpu.matmul %27, %24, %cst_10 {dimension_numbers = #tpu.dot_dimension_numbers<[1], [0], [0], [1], [0, 0, 1, 1], [], []>} : vector<32x40xf32>, vector<40x8xf32>, vector<32x8xf32> -> vector<32x8xf32>
    %29 = arith.addf %26, %28 : vector<32x8xf32>
    %c0_11 = arith.constant 0 : index
    %c0_12 = arith.constant 0 : index
    %30 = vector.load %arg9[%c0_11, %c0_12] : memref<32x4xf32, #tpu.memory_space<vmem>>, vector<32x4xf32>
    %cst_13 = arith.constant dense<0.000000e+00> : vector<32x8xf32>
    %31 = tpu.matmul %30, %8, %cst_13 {dimension_numbers = #tpu.dot_dimension_numbers<[1], [0], [0], [1], [0, 0, 1, 1], [], []>} : vector<32x4xf32>, vector<4x8xf32>, vector<32x8xf32> -> vector<32x8xf32>
    %32 = arith.addf %29, %31 : vector<32x8xf32>
    %c0_14 = arith.constant 0 : index
    %c0_15 = arith.constant 0 : index
    %33 = vector.load %arg10[%c0_14, %c0_15] : memref<32x1xf32, #tpu.memory_space<vmem>>, vector<32x1xf32>
    %34 = vector.broadcast %33 : vector<32x1xf32> to vector<32x8xf32>
    %35 = vector.broadcast %12 : vector<1x8xf32> to vector<32x8xf32>
    %36 = arith.mulf %34, %35 : vector<32x8xf32>
    %37 = arith.addf %32, %36 : vector<32x8xf32>
    %38 = arith.index_cast %arg0 : i32 to index
    %39 = memref.load %arg1[%38] : memref<2xi32, #tpu.memory_space<smem>>
    %40 = tpu.iota {dimensions = array<i32: 1>} : vector<1x4xi32>
    %41 = vector.broadcast %39 : i32 to vector<1x4xi32>
    %42 = arith.cmpi eq, %40, %41 : vector<1x4xi32>
    %43 = arith.extui %42 : vector<1x4xi1> to vector<1x4xi32>
    %44 = arith.sitofp %43 : vector<1x4xi32> to vector<1x4xf32>
    %c0_16 = arith.constant 0 : index
    %c0_17 = arith.constant 0 : index
    %45 = vector.load %arg19[%c0_16, %c0_17] : memref<32x4xf32, #tpu.memory_space<vmem>>, vector<32x4xf32>
    %46 = vector.broadcast %44 : vector<1x4xf32> to vector<32x4xf32>
    %47 = arith.mulf %45, %46 : vector<32x4xf32>
    %cst_18 = arith.constant dense<0.000000e+00> : vector<32xf32>
    %48 = vector.multi_reduction <add>, %47, %cst_18 [1] : vector<32x4xf32> to vector<32xf32>
    %49 = vector.shape_cast %48 : vector<32xf32> to vector<32x1xf32>
    %50 = vector.broadcast %49 : vector<32x1xf32> to vector<32x8xf32>
    %51 = arith.addf %37, %50 : vector<32x8xf32>
    %c0_19 = arith.constant 0 : index
    %c0_20 = arith.constant 0 : index
    %52 = vector.load %arg12[%c0_19, %c0_20] : memref<32x1xf32, #tpu.memory_space<vmem>>, vector<32x1xf32>
    %53 = vector.broadcast %52 : vector<32x1xf32> to vector<32x8xf32>
    %54 = arith.addf %51, %53 : vector<32x8xf32>
    %cst_21 = arith.constant 0.000000e+00 : f32
    %55 = vector.broadcast %cst_21 : f32 to vector<32x8xf32>
    %56 = arith.maximumf %54, %55 : vector<32x8xf32>
    %c0_22 = arith.constant 0 : index
    %c0_23 = arith.constant 0 : index
    %57 = vector.load %arg13[%c0_22, %c0_23] : memref<32x1xf32, #tpu.memory_space<vmem>>, vector<32x1xf32>
    %58 = vector.broadcast %57 : vector<32x1xf32> to vector<32x8xf32>
    %59 = arith.mulf %58, %56 : vector<32x8xf32>
    %cst_24 = arith.constant dense<0.000000e+00> : vector<8xf32>
    %60 = vector.multi_reduction <add>, %59, %cst_24 [0] : vector<32x8xf32> to vector<8xf32>
    %61 = vector.shape_cast %60 : vector<8xf32> to vector<1x8xf32>
    %c0_25 = arith.constant 0 : index
    %c0_26 = arith.constant 0 : index
    %62 = vector.load %arg14[%c0_25, %c0_26] : memref<1x1xf32, #tpu.memory_space<vmem>>, vector<1x1xf32>
    %63 = vector.broadcast %62 : vector<1x1xf32> to vector<1x8xf32>
    %64 = arith.addf %61, %63 : vector<1x8xf32>
    %c0_27 = arith.constant 0 : index
    %c0_28 = arith.constant 0 : index
    %c0_29 = arith.constant 0 : index
    %65 = vector.load %arg16[%c0_27, %c0_28, %c0_29] : memref<1x1x8xf32, #tpu.memory_space<vmem>>, vector<1x1x8xf32>
    %66 = vector.shape_cast %65 : vector<1x1x8xf32> to vector<1x8xf32>
    %67 = vector.shape_cast %64 : vector<1x8xf32> to vector<1x1x8xf32>
    tpu.vector_store %arg16[%c0_27, %c0_28, %c0_29], %67 {strides = array<i32>} : memref<1x1x8xf32, #tpu.memory_space<vmem>>, vector<1x1x8xf32>,
    %cst_30 = arith.constant 1.000000e+00 : f32
    %68 = vector.broadcast %cst_30 : f32 to vector<1x8xf32>
    %69 = arith.subf %68, %14 : vector<1x8xf32>
    %70 = arith.mulf %13, %69 : vector<1x8xf32>
    %71 = arith.subf %64, %11 : vector<1x8xf32>
    %72 = math.absf %71 : vector<1x8xf32>
    %73 = arith.mulf %72, %70 : vector<1x8xf32>
    %c0_31 = arith.constant 0 : index
    %c0_32 = arith.constant 0 : index
    %74 = vector.load %arg20[%c0_31, %c0_32] : memref<1x1xf32, #tpu.memory_space<vmem>>, vector<1x1xf32>
    %75 = vector.shape_cast %73 : vector<1x8xf32> to vector<1x1x8xf32>
    %cst_33 = arith.constant dense<0.000000e+00> : vector<1xf32>
    %76 = vector.multi_reduction <add>, %75, %cst_33 [1, 2] : vector<1x1x8xf32> to vector<1xf32>
    %77 = vector.shape_cast %76 : vector<1xf32> to vector<1x1x1xf32>
    %78 = vector.extract %77[0, 0, 0] : f32 from vector<1x1x1xf32>
    %79 = vector.broadcast %78 : f32 to vector<1x1xf32>
    %80 = arith.addf %74, %79 : vector<1x1xf32>
    %c0_34 = arith.constant 0 : index
    %c0_35 = arith.constant 0 : index
    %81 = vector.load %arg20[%c0_34, %c0_35] : memref<1x1xf32, #tpu.memory_space<vmem>>, vector<1x1xf32>
    tpu.vector_store %arg20[%c0_34, %c0_35], %80 {strides = array<i32>} : memref<1x1xf32, #tpu.memory_space<vmem>>, vector<1x1xf32>,
    %c0_36 = arith.constant 0 : index
    %c0_37 = arith.constant 0 : index
    %82 = vector.load %arg21[%c0_36, %c0_37] : memref<1x1xf32, #tpu.memory_space<vmem>>, vector<1x1xf32>
    %83 = vector.shape_cast %70 : vector<1x8xf32> to vector<1x1x8xf32>
    %cst_38 = arith.constant dense<0.000000e+00> : vector<1xf32>
    %84 = vector.multi_reduction <add>, %83, %cst_38 [1, 2] : vector<1x1x8xf32> to vector<1xf32>
    %85 = vector.shape_cast %84 : vector<1xf32> to vector<1x1x1xf32>
    %86 = vector.extract %85[0, 0, 0] : f32 from vector<1x1x1xf32>
    %87 = vector.broadcast %86 : f32 to vector<1x1xf32>
    %88 = arith.addf %82, %87 : vector<1x1xf32>
    %c0_39 = arith.constant 0 : index
    %c0_40 = arith.constant 0 : index
    %89 = vector.load %arg21[%c0_39, %c0_40] : memref<1x1xf32, #tpu.memory_space<vmem>>, vector<1x1xf32>
    tpu.vector_store %arg21[%c0_39, %c0_40], %88 {strides = array<i32>} : memref<1x1xf32, #tpu.memory_space<vmem>>, vector<1x1xf32>,
    %c1_i32 = arith.constant 1 : i32
    %90 = arith.cmpi eq, %arg0, %c1_i32 : i32
    %91 = arith.extui %90 : i1 to i32
    %c0_i32_41 = arith.constant 0 : i32
    %92 = arith.cmpi ne, %91, %c0_i32_41 : i32
    scf.if %92 {
      %c0_42 = arith.constant 0 : index
      %c0_43 = arith.constant 0 : index
      %93 = vector.load %arg20[%c0_42, %c0_43] : memref<1x1xf32, #tpu.memory_space<vmem>>, vector<1x1xf32>
      %c0_44 = arith.constant 0 : index
      %c0_45 = arith.constant 0 : index
      %94 = vector.load %arg21[%c0_44, %c0_45] : memref<1x1xf32, #tpu.memory_space<vmem>>, vector<1x1xf32>
      %95 = arith.divf %93, %94 : vector<1x1xf32>
      %cst_46 = arith.constant 1.000000e+00 : f32
      %96 = vector.broadcast %cst_46 : f32 to vector<1x1xf32>
      %97 = arith.mulf %95, %96 : vector<1x1xf32>
      %c0_47 = arith.constant 0 : index
      %c0_48 = arith.constant 0 : index
      %98 = vector.load %arg15[%c0_47, %c0_48] : memref<1x1xf32, #tpu.memory_space<vmem>>, vector<1x1xf32>
      tpu.vector_store %arg15[%c0_47, %c0_48], %97 {strides = array<i32>} : memref<1x1xf32, #tpu.memory_space<vmem>>, vector<1x1xf32>,
    } else {
    }
    return
  }
  func.func @transform_0(%arg0: i32, %arg1: memref<2xi32, #tpu.memory_space<smem>>) -> (i32, i32, i32) {
    %c0_i32 = arith.constant 0 : i32
    %c0_i32_0 = arith.constant 0 : i32
    %c0_i32_1 = arith.constant 0 : i32
    return %arg0, %c0_i32, %c0_i32_0 : i32, i32, i32
  }
  func.func @transform_1(%arg0: i32, %arg1: memref<2xi32, #tpu.memory_space<smem>>) -> (i32, i32, i32) {
    %c0_i32 = arith.constant 0 : i32
    %c0_i32_0 = arith.constant 0 : i32
    %c0_i32_1 = arith.constant 0 : i32
    return %arg0, %c0_i32, %c0_i32_0 : i32, i32, i32
  }
  func.func @transform_2(%arg0: i32, %arg1: memref<2xi32, #tpu.memory_space<smem>>) -> (i32, i32) {
    %c0_i32 = arith.constant 0 : i32
    %c0_i32_0 = arith.constant 0 : i32
    %c0_i32_1 = arith.constant 0 : i32
    return %c0_i32, %c0_i32_0 : i32, i32
  }
  func.func @transform_3(%arg0: i32, %arg1: memref<2xi32, #tpu.memory_space<smem>>) -> (i32, i32) {
    %c0_i32 = arith.constant 0 : i32
    %c0_i32_0 = arith.constant 0 : i32
    %c0_i32_1 = arith.constant 0 : i32
    return %c0_i32, %c0_i32_0 : i32, i32
  }
  func.func @transform_4(%arg0: i32, %arg1: memref<2xi32, #tpu.memory_space<smem>>) -> (i32, i32) {
    %c0_i32 = arith.constant 0 : i32
    %c0_i32_0 = arith.constant 0 : i32
    %c0_i32_1 = arith.constant 0 : i32
    return %c0_i32, %c0_i32_0 : i32, i32
  }
  func.func @transform_5(%arg0: i32, %arg1: memref<2xi32, #tpu.memory_space<smem>>) -> (i32, i32) {
    %c0_i32 = arith.constant 0 : i32
    %c0_i32_0 = arith.constant 0 : i32
    %c0_i32_1 = arith.constant 0 : i32
    return %c0_i32, %c0_i32_0 : i32, i32
  }
  func.func @transform_6(%arg0: i32, %arg1: memref<2xi32, #tpu.memory_space<smem>>) -> (i32, i32) {
    %c0_i32 = arith.constant 0 : i32
    %c0_i32_0 = arith.constant 0 : i32
    %c0_i32_1 = arith.constant 0 : i32
    return %c0_i32, %c0_i32_0 : i32, i32
  }
  func.func @transform_7(%arg0: i32, %arg1: memref<2xi32, #tpu.memory_space<smem>>) -> (i32, i32) {
    %c0_i32 = arith.constant 0 : i32
    %c0_i32_0 = arith.constant 0 : i32
    %c0_i32_1 = arith.constant 0 : i32
    return %c0_i32, %c0_i32_0 : i32, i32
  }
  func.func @transform_8(%arg0: i32, %arg1: memref<2xi32, #tpu.memory_space<smem>>) -> (i32, i32) {
    %c0_i32 = arith.constant 0 : i32
    %c0_i32_0 = arith.constant 0 : i32
    %c0_i32_1 = arith.constant 0 : i32
    return %c0_i32, %c0_i32_0 : i32, i32
  }
  func.func @transform_9(%arg0: i32, %arg1: memref<2xi32, #tpu.memory_space<smem>>) -> (i32, i32) {
    %c0_i32 = arith.constant 0 : i32
    %c0_i32_0 = arith.constant 0 : i32
    %c0_i32_1 = arith.constant 0 : i32
    return %c0_i32, %c0_i32_0 : i32, i32
  }
  func.func @transform_10(%arg0: i32, %arg1: memref<2xi32, #tpu.memory_space<smem>>) -> (i32, i32) {
    %c0_i32 = arith.constant 0 : i32
    %c0_i32_0 = arith.constant 0 : i32
    %c0_i32_1 = arith.constant 0 : i32
    return %c0_i32, %c0_i32_0 : i32, i32
  }
  func.func @transform_11(%arg0: i32, %arg1: memref<2xi32, #tpu.memory_space<smem>>) -> (i32, i32) {
    %c0_i32 = arith.constant 0 : i32
    %c0_i32_0 = arith.constant 0 : i32
    %c0_i32_1 = arith.constant 0 : i32
    return %c0_i32, %c0_i32_0 : i32, i32
  }
  func.func @transform_12(%arg0: i32, %arg1: memref<2xi32, #tpu.memory_space<smem>>) -> (i32, i32) {
    %c0_i32 = arith.constant 0 : i32
    %c0_i32_0 = arith.constant 0 : i32
    %c0_i32_1 = arith.constant 0 : i32
    return %c0_i32, %c0_i32_0 : i32, i32
  }
  func.func @transform_13(%arg0: i32, %arg1: memref<2xi32, #tpu.memory_space<smem>>) -> (i32, i32) {
    %c0_i32 = arith.constant 0 : i32
    %c0_i32_0 = arith.constant 0 : i32
    %c0_i32_1 = arith.constant 0 : i32
    return %c0_i32, %c0_i32_0 : i32, i32
  }
  func.func @transform_14(%arg0: i32, %arg1: memref<2xi32, #tpu.memory_space<smem>>) -> (i32, i32, i32) {
    %c0_i32 = arith.constant 0 : i32
    %c0_i32_0 = arith.constant 0 : i32
    %c0_i32_1 = arith.constant 0 : i32
    return %arg0, %c0_i32, %c0_i32_0 : i32, i32, i32
  }
}

</mosaic_0001>

<llo_original>
// kernel: model_forward.1
$region0: #{model_forward.1}
  #allocation0 [shape = 'u32[]', space=smem, size = 0x4, offset = 0x4, fixed_abs, tag = 'smem constant byte address 0x4 - core index']
  #allocation1 [shape = 'u32[144,128]{1,0:T(1,128)}', space=vmem, size = 0x12000, scoped, tag = 'internal scratch']
  #allocation2 [shape = 'f32[32,40]{1,0:T(8,128)}', space=vmem, size = 0x4000, scoped, tag = 'scratch operand']
  #allocation3 [shape = 'f32[32,40]{1,0:T(8,128)}', space=vmem, size = 0x4000, scoped, tag = 'scratch operand']
  #allocation4 [shape = 'f32[32,4]{1,0:T(8,128)}', space=vmem, size = 0x4000, scoped, tag = 'scratch operand']
  #allocation5 [shape = 'f32[1,1]{1,0:T(1,128)}', space=vmem, size = 0x200, scoped, tag = 'scratch operand']
  #allocation6 [shape = 'f32[1,1]{1,0:T(1,128)}', space=vmem, size = 0x200, scoped, tag = 'scratch operand']
  #allocation7 [shape = 's32[1]{0}', space=sflag, size = 0x4, scoped, tag = 'scoped memory for model_forward.1']
  #allocation8 [shape = 'u8[512]{0}', space=smem, size = 0x200, scoped, tag = 'prefetched SMEM operand 0']
  #allocation9 [shape = 'f32[1,1]{1,0:T(1,128)S(1)}', space=vmem, size = 0x200, scoped, tag = 'scoped memory for model_forward.1']
  %s0 = inlined_call_operand.vmem [shape: s32[2], index: 0, kind: input, shape index: {}]
  %s1 = inlined_call_operand.vmem [shape: s32[2,6,8], index: 1, kind: input, shape index: {}]
  %s2 = inlined_call_operand.vmem [shape: f32[2,4,8], index: 2, kind: input, shape index: {}]
  %s3 = inlined_call_operand.vmem [shape: f32[16,40], index: 3, kind: input, shape index: {}]
  %s4 = inlined_call_operand.vmem [shape: f32[16,40], index: 4, kind: input, shape index: {}]
  %s5 = inlined_call_operand.vmem [shape: f32[8,4], index: 5, kind: input, shape index: {}]
  %s6 = inlined_call_operand.vmem [shape: f32[32,16], index: 6, kind: input, shape index: {}]
  %s7 = inlined_call_operand.vmem [shape: f32[32,16], index: 7, kind: input, shape index: {}]
  %s8 = inlined_call_operand.vmem [shape: f32[32,4], index: 8, kind: input, shape index: {}]
  %s9 = inlined_call_operand.vmem [shape: f32[32,1], index: 9, kind: input, shape index: {}]
  %s10 = inlined_call_operand.vmem [shape: f32[32,8], index: 10, kind: input, shape index: {}]
  %s11 = inlined_call_operand.vmem [shape: f32[32,1], index: 11, kind: input, shape index: {}]
  %s12 = inlined_call_operand.vmem [shape: f32[32,1], index: 12, kind: input, shape index: {}]
  %s13 = inlined_call_operand.<no memory space> [shape: f32[1,1], index: 13, kind: input, shape index: {}]
  %s14 = inlined_call_operand.hbm [shape: f32[1,1], index: 14, kind: output, shape index: {0}]
  %s15 = inlined_call_operand.hbm [shape: f32[2,1,8], index: 15, kind: output, shape index: {1}]
  %16 = xla_tuple %s14, %s15
  %s17 = sld [smem:[#allocation0]]
  $region101: #{model_forward.1} parent=0
    _
  %s19 = ssub.s32 1, %s17
  %s20 = scalar_select 0, %s19, %s17
  %s21 = sshll.u32 %s0, 4
  %s22 = int_to_ptr.vmem [resolvable:$true] %s21
  %24 = dma.vmem_to_smem %s22, 16, [#allocation8], [#allocation7]
  %v25 = vstv %s13
  %26 = vst [vmem:[#allocation9] sm:$0x1] %v25
  %27 = dma.done [#allocation7], 16
  %28 = sfence
  $region1: #{model_forward.1} parent=0
    #allocation10 [shape = 'u8[512]{0}', space=vmem, size = 0x400, scoped, tag = 'output window, operand 0, single buffered']
    #allocation11 [shape = 's32[2]{0}', space=sflag, size = 0x8, scoped, tag = 'scoped memory for model_forward.1']
    #allocation12 [shape = 'u8[1024]{0}', space=vmem, size = 0x400, scoped, tag = 'output window, operand 1']
    #allocation13 [shape = 's32[2]{0}', space=sflag, size = 0x8, scoped, tag = 'scoped memory for model_forward.1']
    %29 = vsyncpa [#allocation11], 0
    %30 = vsyncpa [#allocation13], 0
    %s31 = scalar_lea.sflag [#allocation13], 1
    %32 = vsyncpa %s31, 0
    loop: start=0, step=1, limit=4
    $region2: #{model_forward.1} parent=1 // loop_pre_header
      _
    $region3: #{model_forward.1} parent=1 // loop_header
      %s34 = sphi 0, %s38
      %p35 = scmp.ge.s32.totalorder %s34, 4
      %s44 = sphi 0, %s46
      %s47 = sphi 0, %s44
      %s48 = sphi 0, %s47
      %s64 = sphi 0, %s48
      %s70 = sphi 0, %s72
      %s73 = sphi 0, %s70
      %s74 = sphi 0, %s73
      %s90 = sphi 0, %s74
      %s94 = sphi 0, %s94
      %s96 = sphi 0, %s94
      %s97 = sphi 0, %s96
      %s111 = sphi 0, %s97
      %s115 = sphi 0, %s115
      %s117 = sphi 0, %s115
      %s118 = sphi 0, %s117
      %s132 = sphi 0, %s118
      %s136 = sphi 0, %s136
      %s138 = sphi 0, %s136
      %s139 = sphi 0, %s138
      %s153 = sphi 0, %s139
      %s157 = sphi 0, %s157
      %s159 = sphi 0, %s157
      %s160 = sphi 0, %s159
      %s174 = sphi 0, %s160
      %s178 = sphi 0, %s178
      %s180 = sphi 0, %s178
      %s181 = sphi 0, %s180
      %s195 = sphi 0, %s181
      %s199 = sphi 0, %s199
      %s201 = sphi 0, %s199
      %s202 = sphi 0, %s201
      %s216 = sphi 0, %s202
      %s220 = sphi 0, %s220
      %s222 = sphi 0, %s220
      %s223 = sphi 0, %s222
      %s237 = sphi 0, %s223
      %s241 = sphi 0, %s241
      %s243 = sphi 0, %s241
      %s244 = sphi 0, %s243
      %s258 = sphi 0, %s244
      %s262 = sphi 0, %s262
      %s264 = sphi 0, %s262
      %s265 = sphi 0, %s264
      %s279 = sphi 0, %s265
      %s283 = sphi 0, %s283
      %s285 = sphi 0, %s283
      %s286 = sphi 0, %s285
      %s300 = sphi 0, %s286
      %s304 = sphi 0, %s304
      %s306 = sphi 0, %s304
      %s307 = sphi 0, %s306
      %s321 = sphi 0, %s307
      %s325 = sphi 0, %s325
      %s327 = sphi 0, %s325
      %s328 = sphi 0, %s327
      %s342 = sphi 0, %s328
      %s348 = sphi 0, %s350
      %s351 = sphi 0, %s348
      %s352 = sphi 0, %s351
      %s368 = sphi 0, %s352
    $region4: #{model_forward.1} parent=1 // loop_header_branch
      %37 = sbr.rel (%p35) target = $region8
    $region5: #{model_forward.1} parent=1 // loop_body
      %s39 = ssub.s32 %s34, 1
      %s40 = ssub.s32 %s34, 2
      %s41 = sadd.s32 %s34, 1
      %s42 = ssub.s32 %s34, %s41
      %p43 = scmp.eq.s32.totalorder %s42, 0
      %s45 = sadd.s32 %s44, 1
      %s46 = scalar_select %p43, %s44, %s45
      %p49 = pneg %p43
      %p50 = scmp.eq.s32.totalorder %s34, 1
      %p51 = por %p49, %p50
      %p52 = scmp.ne.s32.totalorder %s44, %s47
      %p53 = scmp.eq.s32.totalorder %s34, 0
      %p54 = por %p52, %p53
      %p55 = scmp.ne.s32.totalorder %s44, %s47
      %p56 = scmp.eq.s32.totalorder %s39, 1
      %p57 = por %p55, %p56
      %p58 = scmp.ne.s32.totalorder %s47, %s48
      %p59 = scmp.eq.s32.totalorder %s39, 0
      %p60 = por %p58, %p59
      %p61 = scmp.ne.s32.totalorder %s47, %s48
      %p62 = scmp.eq.s32.totalorder %s40, 1
      %p63 = por %p61, %p62
      %p65 = scmp.ne.s32.totalorder %s48, %s64
      %p66 = scmp.eq.s32.totalorder %s40, 0
      %p67 = por %p65, %p66
      %s68 = ssub.s32 %s34, %s41
      %p69 = scmp.eq.s32.totalorder %s68, 0
      %s71 = sadd.s32 %s70, 1
      %s72 = scalar_select %p69, %s70, %s71
      %p75 = pneg %p69
      %p76 = scmp.eq.s32.totalorder %s34, 1
      %p77 = por %p75, %p76
      %p78 = scmp.ne.s32.totalorder %s70, %s73
      %p79 = scmp.eq.s32.totalorder %s34, 0
      %p80 = por %p78, %p79
      %p81 = scmp.ne.s32.totalorder %s70, %s73
      %p82 = scmp.eq.s32.totalorder %s39, 1
      %p83 = por %p81, %p82
      %p84 = scmp.ne.s32.totalorder %s73, %s74
      %p85 = scmp.eq.s32.totalorder %s39, 0
      %p86 = por %p84, %p85
      %p87 = scmp.ne.s32.totalorder %s73, %s74
      %p88 = scmp.eq.s32.totalorder %s40, 1
      %p89 = por %p87, %p88
      %p91 = scmp.ne.s32.totalorder %s74, %s90
      %p92 = scmp.eq.s32.totalorder %s40, 0
      %p93 = por %p91, %p92
      %s95 = sadd.s32 %s94, 1
      %p98 = scmp.eq.s32.totalorder %s34, 1
      %p99 = scmp.ne.s32.totalorder %s94, %s96
      %p100 = scmp.eq.s32.totalorder %s34, 0
      %p101 = por %p99, %p100
      %p102 = scmp.ne.s32.totalorder %s94, %s96
      %p103 = scmp.eq.s32.totalorder %s39, 1
      %p104 = por %p102, %p103
      %p105 = scmp.ne.s32.totalorder %s96, %s97
      %p106 = scmp.eq.s32.totalorder %s39, 0
      %p107 = por %p105, %p106
      %p108 = scmp.ne.s32.totalorder %s96, %s97
      %p109 = scmp.eq.s32.totalorder %s40, 1
      %p110 = por %p108, %p109
      %p112 = scmp.ne.s32.totalorder %s97, %s111
      %p113 = scmp.eq.s32.totalorder %s40, 0
      %p114 = por %p112, %p113
      %s116 = sadd.s32 %s115, 1
      %p119 = scmp.eq.s32.totalorder %s34, 1
      %p120 = scmp.ne.s32.totalorder %s115, %s117
      %p121 = scmp.eq.s32.totalorder %s34, 0
      %p122 = por %p120, %p121
      %p123 = scmp.ne.s32.totalorder %s115, %s117
      %p124 = scmp.eq.s32.totalorder %s39, 1
      %p125 = por %p123, %p124
      %p126 = scmp.ne.s32.totalorder %s117, %s118
      %p127 = scmp.eq.s32.totalorder %s39, 0
      %p128 = por %p126, %p127
      %p129 = scmp.ne.s32.totalorder %s117, %s118
      %p130 = scmp.eq.s32.totalorder %s40, 1
      %p131 = por %p129, %p130
      %p133 = scmp.ne.s32.totalorder %s118, %s132
      %p134 = scmp.eq.s32.totalorder %s40, 0
      %p135 = por %p133, %p134
      %s137 = sadd.s32 %s136, 1
      %p140 = scmp.eq.s32.totalorder %s34, 1
      %p141 = scmp.ne.s32.totalorder %s136, %s138
      %p142 = scmp.eq.s32.totalorder %s34, 0
      %p143 = por %p141, %p142
      %p144 = scmp.ne.s32.totalorder %s136, %s138
      %p145 = scmp.eq.s32.totalorder %s39, 1
      %p146 = por %p144, %p145
      %p147 = scmp.ne.s32.totalorder %s138, %s139
      %p148 = scmp.eq.s32.totalorder %s39, 0
      %p149 = por %p147, %p148
      %p150 = scmp.ne.s32.totalorder %s138, %s139
      %p151 = scmp.eq.s32.totalorder %s40, 1
      %p152 = por %p150, %p151
      %p154 = scmp.ne.s32.totalorder %s139, %s153
      %p155 = scmp.eq.s32.totalorder %s40, 0
      %p156 = por %p154, %p155
      %s158 = sadd.s32 %s157, 1
      %p161 = scmp.eq.s32.totalorder %s34, 1
      %p162 = scmp.ne.s32.totalorder %s157, %s159
      %p163 = scmp.eq.s32.totalorder %s34, 0
      %p164 = por %p162, %p163
      %p165 = scmp.ne.s32.totalorder %s157, %s159
      %p166 = scmp.eq.s32.totalorder %s39, 1
      %p167 = por %p165, %p166
      %p168 = scmp.ne.s32.totalorder %s159, %s160
      %p169 = scmp.eq.s32.totalorder %s39, 0
      %p170 = por %p168, %p169
      %p171 = scmp.ne.s32.totalorder %s159, %s160
      %p172 = scmp.eq.s32.totalorder %s40, 1
      %p173 = por %p171, %p172
      %p175 = scmp.ne.s32.totalorder %s160, %s174
      %p176 = scmp.eq.s32.totalorder %s40, 0
      %p177 = por %p175, %p176
      %s179 = sadd.s32 %s178, 1
      %p182 = scmp.eq.s32.totalorder %s34, 1
      %p183 = scmp.ne.s32.totalorder %s178, %s180
      %p184 = scmp.eq.s32.totalorder %s34, 0
      %p185 = por %p183, %p184
      %p186 = scmp.ne.s32.totalorder %s178, %s180
      %p187 = scmp.eq.s32.totalorder %s39, 1
      %p188 = por %p186, %p187
      %p189 = scmp.ne.s32.totalorder %s180, %s181
      %p190 = scmp.eq.s32.totalorder %s39, 0
      %p191 = por %p189, %p190
      %p192 = scmp.ne.s32.totalorder %s180, %s181
      %p193 = scmp.eq.s32.totalorder %s40, 1
      %p194 = por %p192, %p193
      %p196 = scmp.ne.s32.totalorder %s181, %s195
      %p197 = scmp.eq.s32.totalorder %s40, 0
      %p198 = por %p196, %p197
      %s200 = sadd.s32 %s199, 1
      %p203 = scmp.eq.s32.totalorder %s34, 1
      %p204 = scmp.ne.s32.totalorder %s199, %s201
      %p205 = scmp.eq.s32.totalorder %s34, 0
      %p206 = por %p204, %p205
      %p207 = scmp.ne.s32.totalorder %s199, %s201
      %p208 = scmp.eq.s32.totalorder %s39, 1
      %p209 = por %p207, %p208
      %p210 = scmp.ne.s32.totalorder %s201, %s202
      %p211 = scmp.eq.s32.totalorder %s39, 0
      %p212 = por %p210, %p211
      %p213 = scmp.ne.s32.totalorder %s201, %s202
      %p214 = scmp.eq.s32.totalorder %s40, 1
      %p215 = por %p213, %p214
      %p217 = scmp.ne.s32.totalorder %s202, %s216
      %p218 = scmp.eq.s32.totalorder %s40, 0
      %p219 = por %p217, %p218
      %s221 = sadd.s32 %s220, 1
      %p224 = scmp.eq.s32.totalorder %s34, 1
      %p225 = scmp.ne.s32.totalorder %s220, %s222
      %p226 = scmp.eq.s32.totalorder %s34, 0
      %p227 = por %p225, %p226
      %p228 = scmp.ne.s32.totalorder %s220, %s222
      %p229 = scmp.eq.s32.totalorder %s39, 1
      %p230 = por %p228, %p229
      %p231 = scmp.ne.s32.totalorder %s222, %s223
      %p232 = scmp.eq.s32.totalorder %s39, 0
      %p233 = por %p231, %p232
      %p234 = scmp.ne.s32.totalorder %s222, %s223
      %p235 = scmp.eq.s32.totalorder %s40, 1
      %p236 = por %p234, %p235
      %p238 = scmp.ne.s32.totalorder %s223, %s237
      %p239 = scmp.eq.s32.totalorder %s40, 0
      %p240 = por %p238, %p239
      %s242 = sadd.s32 %s241, 1
      %p245 = scmp.eq.s32.totalorder %s34, 1
      %p246 = scmp.ne.s32.totalorder %s241, %s243
      %p247 = scmp.eq.s32.totalorder %s34, 0
      %p248 = por %p246, %p247
      %p249 = scmp.ne.s32.totalorder %s241, %s243
      %p250 = scmp.eq.s32.totalorder %s39, 1
      %p251 = por %p249, %p250
      %p252 = scmp.ne.s32.totalorder %s243, %s244
      %p253 = scmp.eq.s32.totalorder %s39, 0
      %p254 = por %p252, %p253
      %p255 = scmp.ne.s32.totalorder %s243, %s244
      %p256 = scmp.eq.s32.totalorder %s40, 1
      %p257 = por %p255, %p256
      %p259 = scmp.ne.s32.totalorder %s244, %s258
      %p260 = scmp.eq.s32.totalorder %s40, 0
      %p261 = por %p259, %p260
      %s263 = sadd.s32 %s262, 1
      %p266 = scmp.eq.s32.totalorder %s34, 1
      %p267 = scmp.ne.s32.totalorder %s262, %s264
      %p268 = scmp.eq.s32.totalorder %s34, 0
      %p269 = por %p267, %p268
      %p270 = scmp.ne.s32.totalorder %s262, %s264
      %p271 = scmp.eq.s32.totalorder %s39, 1
      %p272 = por %p270, %p271
      %p273 = scmp.ne.s32.totalorder %s264, %s265
      %p274 = scmp.eq.s32.totalorder %s39, 0
      %p275 = por %p273, %p274
      %p276 = scmp.ne.s32.totalorder %s264, %s265
      %p277 = scmp.eq.s32.totalorder %s40, 1
      %p278 = por %p276, %p277
      %p280 = scmp.ne.s32.totalorder %s265, %s279
      %p281 = scmp.eq.s32.totalorder %s40, 0
      %p282 = por %p280, %p281
      %s284 = sadd.s32 %s283, 1
      %p287 = scmp.eq.s32.totalorder %s34, 1
      %p288 = scmp.ne.s32.totalorder %s283, %s285
      %p289 = scmp.eq.s32.totalorder %s34, 0
      %p290 = por %p288, %p289
      %p291 = scmp.ne.s32.totalorder %s283, %s285
      %p292 = scmp.eq.s32.totalorder %s39, 1
      %p293 = por %p291, %p292
      %p294 = scmp.ne.s32.totalorder %s285, %s286
      %p295 = scmp.eq.s32.totalorder %s39, 0
      %p296 = por %p294, %p295
      %p297 = scmp.ne.s32.totalorder %s285, %s286
      %p298 = scmp.eq.s32.totalorder %s40, 1
      %p299 = por %p297, %p298
      %p301 = scmp.ne.s32.totalorder %s286, %s300
      %p302 = scmp.eq.s32.totalorder %s40, 0
      %p303 = por %p301, %p302
      %s305 = sadd.s32 %s304, 1
      %p308 = scmp.eq.s32.totalorder %s34, 1
      %p309 = scmp.ne.s32.totalorder %s304, %s306
      %p310 = scmp.eq.s32.totalorder %s34, 0
      %p311 = por %p309, %p310
      %p312 = scmp.ne.s32.totalorder %s304, %s306
      %p313 = scmp.eq.s32.totalorder %s39, 1
      %p314 = por %p312, %p313
      %p315 = scmp.ne.s32.totalorder %s306, %s307
      %p316 = scmp.eq.s32.totalorder %s39, 0
      %p317 = por %p315, %p316
      %p318 = scmp.ne.s32.totalorder %s306, %s307
      %p319 = scmp.eq.s32.totalorder %s40, 1
      %p320 = por %p318, %p319
      %p322 = scmp.ne.s32.totalorder %s307, %s321
      %p323 = scmp.eq.s32.totalorder %s40, 0
      %p324 = por %p322, %p323
      %s326 = sadd.s32 %s325, 1
      %p329 = scmp.eq.s32.totalorder %s34, 1
      %p330 = scmp.ne.s32.totalorder %s325, %s327
      %p331 = scmp.eq.s32.totalorder %s34, 0
      %p332 = por %p330, %p331
      %p333 = scmp.ne.s32.totalorder %s325, %s327
      %p334 = scmp.eq.s32.totalorder %s39, 1
      %p335 = por %p333, %p334
      %p336 = scmp.ne.s32.totalorder %s327, %s328
      %p337 = scmp.eq.s32.totalorder %s39, 0
      %p338 = por %p336, %p337
      %p339 = scmp.ne.s32.totalorder %s327, %s328
      %p340 = scmp.eq.s32.totalorder %s40, 1
      %p341 = por %p339, %p340
      %p343 = scmp.ne.s32.totalorder %s328, %s342
      %p344 = scmp.eq.s32.totalorder %s40, 0
      %p345 = por %p343, %p344
      %s346 = ssub.s32 %s34, %s41
      %p347 = scmp.eq.s32.totalorder %s346, 0
      %s349 = sadd.s32 %s348, 1
      %s350 = scalar_select %p347, %s348, %s349
      %p353 = pneg %p347
      %p354 = scmp.eq.s32.totalorder %s34, 1
      %p355 = por %p353, %p354
      %p356 = scmp.ne.s32.totalorder %s348, %s351
      %p357 = scmp.eq.s32.totalorder %s34, 0
      %p358 = por %p356, %p357
      %p359 = scmp.ne.s32.totalorder %s348, %s351
      %p360 = scmp.eq.s32.totalorder %s39, 1
      %p361 = por %p359, %p360
      %p362 = scmp.ne.s32.totalorder %s351, %s352
      %p363 = scmp.eq.s32.totalorder %s39, 0
      %p364 = por %p362, %p363
      %p365 = scmp.ne.s32.totalorder %s351, %s352
      %p366 = scmp.eq.s32.totalorder %s40, 1
      %p367 = por %p365, %p366
      %p369 = scmp.ne.s32.totalorder %s352, %s368
      %p370 = scmp.eq.s32.totalorder %s40, 0
      %p371 = por %p369, %p370
      %p372 = scmp.le.s32.totalorder 1, %s34
      %p373 = scmp.lt.s32.totalorder %s34, 3
      %p374 = pnand %p372, %p373
      %p375 = pneg %p374
      // Predicated region
      $region9: #{model_forward.1} parent=5 // pred_check
        _
      $region10: #{model_forward.1} parent=5 // pred_check_branch
        %377 = sbr.rel (%p374) target = $region12
      $region11: #{model_forward.1} parent=5 // pred_region
        %s378 = ssub.s32 %s34, 1
        // Predicated region
        $region13: #{model_forward.1} parent=11 // pred_check
          %p379 = pneg %p107
        $region14: #{model_forward.1} parent=11 // pred_check_branch
          %381 = sbr.rel (%p379) target = $region16
        $region15: #{model_forward.1} parent=11 // pred_region
          _
        $region16: #{model_forward.1} parent=11 // pred_fallthru
          _
        // Predicated region
        $region17: #{model_forward.1} parent=11 // pred_check
          %p382 = pneg %p128
        $region18: #{model_forward.1} parent=11 // pred_check_branch
          %384 = sbr.rel (%p382) target = $region20
        $region19: #{model_forward.1} parent=11 // pred_region
          _
        $region20: #{model_forward.1} parent=11 // pred_fallthru
          _
        // Predicated region
        $region21: #{model_forward.1} parent=11 // pred_check
          %p385 = pneg %p149
        $region22: #{model_forward.1} parent=11 // pred_check_branch
          %387 = sbr.rel (%p385) target = $region24
        $region23: #{model_forward.1} parent=11 // pred_region
          _
        $region24: #{model_forward.1} parent=11 // pred_fallthru
          _
        // Predicated region
        $region25: #{model_forward.1} parent=11 // pred_check
          %p388 = pneg %p170
        $region26: #{model_forward.1} parent=11 // pred_check_branch
          %390 = sbr.rel (%p388) target = $region28
        $region27: #{model_forward.1} parent=11 // pred_region
          _
        $region28: #{model_forward.1} parent=11 // pred_fallthru
          _
        // Predicated region
        $region29: #{model_forward.1} parent=11 // pred_check
          %p391 = pneg %p191
        $region30: #{model_forward.1} parent=11 // pred_check_branch
          %393 = sbr.rel (%p391) target = $region32
        $region31: #{model_forward.1} parent=11 // pred_region
          _
        $region32: #{model_forward.1} parent=11 // pred_fallthru
          _
        // Predicated region
        $region33: #{model_forward.1} parent=11 // pred_check
          %p394 = pneg %p212
        $region34: #{model_forward.1} parent=11 // pred_check_branch
          %396 = sbr.rel (%p394) target = $region36
        $region35: #{model_forward.1} parent=11 // pred_region
          _
        $region36: #{model_forward.1} parent=11 // pred_fallthru
          _
        // Predicated region
        $region37: #{model_forward.1} parent=11 // pred_check
          %p397 = pneg %p233
        $region38: #{model_forward.1} parent=11 // pred_check_branch
          %399 = sbr.rel (%p397) target = $region40
        $region39: #{model_forward.1} parent=11 // pred_region
          _
        $region40: #{model_forward.1} parent=11 // pred_fallthru
          _
        // Predicated region
        $region41: #{model_forward.1} parent=11 // pred_check
          %p400 = pneg %p254
        $region42: #{model_forward.1} parent=11 // pred_check_branch
          %402 = sbr.rel (%p400) target = $region44
        $region43: #{model_forward.1} parent=11 // pred_region
          _
        $region44: #{model_forward.1} parent=11 // pred_fallthru
          _
        // Predicated region
        $region45: #{model_forward.1} parent=11 // pred_check
          %p403 = pneg %p275
        $region46: #{model_forward.1} parent=11 // pred_check_branch
          %405 = sbr.rel (%p403) target = $region48
        $region47: #{model_forward.1} parent=11 // pred_region
          _
        $region48: #{model_forward.1} parent=11 // pred_fallthru
          _
        // Predicated region
        $region49: #{model_forward.1} parent=11 // pred_check
          %p406 = pneg %p296
        $region50: #{model_forward.1} parent=11 // pred_check_branch
          %408 = sbr.rel (%p406) target = $region52
        $region51: #{model_forward.1} parent=11 // pred_region
          _
        $region52: #{model_forward.1} parent=11 // pred_fallthru
          _
        // Predicated region
        $region53: #{model_forward.1} parent=11 // pred_check
          %p409 = pneg %p317
        $region54: #{model_forward.1} parent=11 // pred_check_branch
          %411 = sbr.rel (%p409) target = $region56
        $region55: #{model_forward.1} parent=11 // pred_region
          _
        $region56: #{model_forward.1} parent=11 // pred_fallthru
          _
      $region12: #{model_forward.1} parent=5 // pred_fallthru
        _
      %p412 = scmp.lt.s32.totalorder %s34, 2
      // Predicated region
      $region57: #{model_forward.1} parent=5 // pred_check
        %p413 = pneg %p412
      $region58: #{model_forward.1} parent=5 // pred_check_branch
        %415 = sbr.rel (%p413) target = $region60
      $region59: #{model_forward.1} parent=5 // pred_region
        // Predicated region
        $region61: #{model_forward.1} parent=59 // pred_check
          %p416 = pneg %p54
        $region62: #{model_forward.1} parent=59 // pred_check_branch
          %418 = sbr.rel (%p416) target = $region64
        $region63: #{model_forward.1} parent=59 // pred_region
          %p419 = scmp.lt.s32.totalorder %s34, 1
          %s420 = scalar_select %p419, %s34, 1
          %s421 = smul.addr %s420, 8
          %s422 = scalar_lea.vmem %s1, %s421
        $region64: #{model_forward.1} parent=59 // pred_fallthru
          _
        // Predicated region
        $region65: #{model_forward.1} parent=59 // pred_check
          %p423 = pneg %p80
        $region66: #{model_forward.1} parent=59 // pred_check_branch
          %425 = sbr.rel (%p423) target = $region68
        $region67: #{model_forward.1} parent=59 // pred_region
          %p426 = scmp.lt.s32.totalorder %s34, 1
          %s427 = scalar_select %p426, %s34, 1
          %s428 = smul.addr %s427, 4
          %s429 = scalar_lea.vmem %s2, %s428
        $region68: #{model_forward.1} parent=59 // pred_fallthru
          _
      $region60: #{model_forward.1} parent=5 // pred_fallthru
        _
      %p430 = scmp.le.s32.totalorder 1, %s34
      %p431 = scmp.lt.s32.totalorder %s34, 3
      %p432 = pnand %p430, %p431
      %p433 = pneg %p432
      // Predicated region
      $region69: #{model_forward.1} parent=5 // pred_check
        _
      $region70: #{model_forward.1} parent=5 // pred_check_branch
        %435 = sbr.rel (%p432) target = $region72
      $region71: #{model_forward.1} parent=5 // pred_region
        %s436 = ssub.s32 %s34, 1
        %p437 = scmp.lt.s32.totalorder %s39, 1
        %s438 = scalar_select %p437, %s39, 1
        %s439 = smul.addr %s438, 8
        %s440 = scalar_lea.vmem %s1, %s439
        %p441 = pneg %p60
        %p442 = pneg %p57
        %p443 = scmp.lt.s32.totalorder %s39, 1
        %s444 = scalar_select %p443, %s39, 1
        %s445 = smul.addr %s444, 4
        %s446 = scalar_lea.vmem %s2, %s445
        %p447 = pneg %p86
        %p448 = pneg %p83
        %p449 = pneg %p107
        %p450 = pneg %p104
        %p451 = pneg %p128
        %p452 = pneg %p125
        %p453 = pneg %p149
        %p454 = pneg %p146
        %p455 = pneg %p170
        %p456 = pneg %p167
        %p457 = pneg %p191
        %p458 = pneg %p188
        %p459 = pneg %p212
        %p460 = pneg %p209
        %p461 = pneg %p233
        %p462 = pneg %p230
        %p463 = pneg %p254
        %p464 = pneg %p251
        %p465 = pneg %p275
        %p466 = pneg %p272
        %p467 = pneg %p296
        %p468 = pneg %p293
        %p469 = pneg %p317
        %p470 = pneg %p314
        %p471 = pneg %p338
        %p472 = pneg %p335
        %p473 = pneg %p364
        %p474 = pneg %p361
        %s475 = sand.u32 %s351, 1
        %s476 = scalar_lea.sflag [#allocation13], %s475
        %s477 = sand.u32 %s351, 1
        %s478 = scalar_lea.vmem [#allocation12], %s477
        %p479 = scmp.lt.s32.totalorder %s39, 1
        %s480 = scalar_select %p479, %s39, 1
        %s481 = smul.addr %s480, 8
        %s482 = scalar_lea.vmem %s1, %s481
        %p483 = scmp.lt.s32.totalorder %s39, 1
        %s484 = scalar_select %p483, %s39, 1
        %s485 = smul.addr %s484, 4
        %s486 = scalar_lea.vmem %s2, %s485
        %p487 = scmp.eq.s32.totalorder %s39, 0
        // Predicated region
        $region73: #{model_forward.1} parent=71 // pred_check
          %p488 = pneg %p487
        $region74: #{model_forward.1} parent=71 // pred_check_branch
          %490 = sbr.rel (%p488) target = $region76
        $region75: #{model_forward.1} parent=71 // pred_region
          %v491 = vld [vmem:[%s6] sm:$0xff]
          %v492 = vld [vmem:[%s6 + $0x8] sm:$0xff]
          %v493 = vld [vmem:[%s6 + $0x10] sm:$0xff]
          %v494 = vld [vmem:[%s6 + $0x18] sm:$0xff]
          %v495 = vld [vmem:[%s3] sm:$0xff]
          %v496 = vld [vmem:[%s3 + $0x8] sm:$0xff]
          %vm497 = vcmask 130048
          %v499 = vsel %vm497, %v491, 0
          %v502 = vsel %vm497, %v492, 0
          %v505 = vsel %vm497, %v493, 0
          %v508 = vsel %vm497, %v494, 0
          %510 = vmatprep.subr.mxu0 0.0
          %511 = vmatpush1.msra.mxu0 %v495
          %512 = vmatprep.subr.mxu0 0.0
          %513 = vmatpush1.msra.mxu0 %v496
          %514 = vmatprep.subr.mxu0 0.0
          %515 = vmatpush1.msra.mxu0 0.0
          %516 = vmatprep.subr.mxu0 0.0
          %517 = vmatpush1.msra.mxu0 0.0
          %518 = vmatprep.subr.mxu0 0.0
          %519 = vmatpush1.msra.mxu0 0.0
          %520 = vmatprep.subr.mxu0 0.0
          %521 = vmatpush1.msra.mxu0 0.0
          %522 = vmatprep.subr.mxu0 0.0
          %523 = vmatpush1.msra.mxu0 0.0
          %524 = vmatprep.subr.mxu0 0.0
          %525 = vmatpush1.msra.mxu0 0.0
          %526 = vmatprep.subr.mxu0 0.0
          %527 = vmatpush1.msra.mxu0 0.0
          %528 = vmatprep.subr.mxu0 0.0
          %529 = vmatpush1.msra.mxu0 0.0
          %530 = vmatprep.subr.mxu0 0.0
          %531 = vmatpush1.msra.mxu0 0.0
          %532 = vmatprep.subr.mxu0 0.0
          %533 = vmatpush1.msra.mxu0 0.0
          %534 = vmatprep.subr.mxu0 0.0
          %535 = vmatpush1.msra.mxu0 0.0
          %536 = vmatprep.subr.mxu0 0.0
          %537 = vmatpush1.msra.mxu0 0.0
          %538 = vmatprep.subr.mxu0 0.0
          %539 = vmatpush1.msra.mxu0 0.0
          %540 = vmatprep.subr.mxu0 0.0
          %541 = vmatpush1.msra.mxu0 0.0
          %542 = vmatprep.subr.mxu0 0.0
          %543 = vmatpush1.msra.mxu0 0.0
          %544 = vmatprep.subr.mxu0 0.0
          %545 = vmatpush1.msra.mxu0 0.0
          %546 = vmatprep.subr.mxu0 0.0
          %547 = vmatpush1.msra.mxu0 0.0
          %548 = vmatprep.subr.mxu0 0.0
          %549 = vmatpush1.msra.mxu0 0.0
          %550 = vmatprep.subr.mxu0 0.0
          %551 = vmatpush1.msra.mxu0 0.0
          %552 = vmatprep.subr.mxu0 0.0
          %553 = vmatpush1.msra.mxu0 0.0
          %554 = vmatprep.subr.mxu0 0.0
          %555 = vmatpush1.msra.mxu0 0.0
          %556 = vmatprep.subr.mxu0 0.0
          %557 = vmatpush1.msra.mxu0 0.0
          %558 = vmatprep.subr.mxu0 0.0
          %559 = vmatpush1.msra.mxu0 0.0
          %560 = vmatprep.subr.mxu0 0.0
          %561 = vmatpush1.msra.mxu0 0.0
          %562 = vmatprep.subr.mxu0 0.0
          %563 = vmatpush1.msra.mxu0 0.0
          %564 = vmatprep.subr.mxu0 0.0
          %565 = vmatpush1.msra.mxu0 0.0
          %566 = vmatprep.subr.mxu0 0.0
          %567 = vmatpush1.msra.mxu0 0.0
          %568 = vmatprep.subr.mxu0 0.0
          %569 = vmatpush1.msra.mxu0 0.0
          %570 = vmatprep.subr.mxu0 0.0
          %571 = vmatpush1.msra.mxu0 0.0
          %572 = vmatprep.subr.mxu0 0.0
          %573 = vmatpush1.msra.mxu0 0.0
          %574 = vmatprep.mubr.f32.mxu0 0.0
          %575 = vmatmul.mubr.f32.gmra.mrb[0].mxu0 %v499
          %v576 = vpop.f32.mrb[0].mxu0
          %v577 = vadd.f32 0.0, %v576
          %v578 = vpop.f32.mrb[0].mxu0
          %579 = vmatprep.mubr.f32.mxu0 0.0
          %580 = vmatmul.mubr.f32.gmra.mrb[0].mxu0 %v502
          %v581 = vpop.f32.mrb[0].mxu0
          %v582 = vadd.f32 0.0, %v581
          %v583 = vpop.f32.mrb[0].mxu0
          %584 = vmatprep.mubr.f32.mxu0 0.0
          %585 = vmatmul.mubr.f32.gmra.mrb[0].mxu0 %v505
          %v586 = vpop.f32.mrb[0].mxu0
          %v587 = vadd.f32 0.0, %v586
          %v588 = vpop.f32.mrb[0].mxu0
          %589 = vmatprep.mubr.f32.mxu0 0.0
          %590 = vmatmul.mubr.f32.gmra.mrb[0].mxu0 %v508
          %v591 = vpop.f32.mrb[0].mxu0
          %v592 = vadd.f32 0.0, %v591
          %v593 = vpop.f32.mrb[0].mxu0
          %594 = vdwg.mxu0
          %vm595 = vcmask 326656
          %596 = vst.msk [vmem:[#allocation2] sm:$0xff] %vm595, %v577
          %597 = vst.msk [vmem:[#allocation2 + $0x8] sm:$0xff] %vm595, %v582
          %598 = vst.msk [vmem:[#allocation2 + $0x10] sm:$0xff] %vm595, %v587
          %599 = vst.msk [vmem:[#allocation2 + $0x18] sm:$0xff] %vm595, %v592
          %v600 = vld [vmem:[%s7] sm:$0xff]
          %v601 = vld [vmem:[%s7 + $0x8] sm:$0xff]
          %v602 = vld [vmem:[%s7 + $0x10] sm:$0xff]
          %v603 = vld [vmem:[%s7 + $0x18] sm:$0xff]
          %v604 = vld [vmem:[%s4] sm:$0xff]
          %v605 = vld [vmem:[%s4 + $0x8] sm:$0xff]
          %v607 = vsel %vm497, %v600, 0
          %v610 = vsel %vm497, %v601, 0
          %v613 = vsel %vm497, %v602, 0
          %v616 = vsel %vm497, %v603, 0
          %618 = vmatprep.subr.mxu0 0.0
          %619 = vmatpush1.msra.mxu0 %v604
          %620 = vmatprep.subr.mxu0 0.0
          %621 = vmatpush1.msra.mxu0 %v605
          %622 = vmatprep.subr.mxu0 0.0
          %623 = vmatpush1.msra.mxu0 0.0
          %624 = vmatprep.subr.mxu0 0.0
          %625 = vmatpush1.msra.mxu0 0.0
          %626 = vmatprep.subr.mxu0 0.0
          %627 = vmatpush1.msra.mxu0 0.0
          %628 = vmatprep.subr.mxu0 0.0
          %629 = vmatpush1.msra.mxu0 0.0
          %630 = vmatprep.subr.mxu0 0.0
          %631 = vmatpush1.msra.mxu0 0.0
          %632 = vmatprep.subr.mxu0 0.0
          %633 = vmatpush1.msra.mxu0 0.0
          %634 = vmatprep.subr.mxu0 0.0
          %635 = vmatpush1.msra.mxu0 0.0
          %636 = vmatprep.subr.mxu0 0.0
          %637 = vmatpush1.msra.mxu0 0.0
          %638 = vmatprep.subr.mxu0 0.0
          %639 = vmatpush1.msra.mxu0 0.0
          %640 = vmatprep.subr.mxu0 0.0
          %641 = vmatpush1.msra.mxu0 0.0
          %642 = vmatprep.subr.mxu0 0.0
          %643 = vmatpush1.msra.mxu0 0.0
          %644 = vmatprep.subr.mxu0 0.0
          %645 = vmatpush1.msra.mxu0 0.0
          %646 = vmatprep.subr.mxu0 0.0
          %647 = vmatpush1.msra.mxu0 0.0
          %648 = vmatprep.subr.mxu0 0.0
          %649 = vmatpush1.msra.mxu0 0.0
          %650 = vmatprep.subr.mxu0 0.0
          %651 = vmatpush1.msra.mxu0 0.0
          %652 = vmatprep.subr.mxu0 0.0
          %653 = vmatpush1.msra.mxu0 0.0
          %654 = vmatprep.subr.mxu0 0.0
          %655 = vmatpush1.msra.mxu0 0.0
          %656 = vmatprep.subr.mxu0 0.0
          %657 = vmatpush1.msra.mxu0 0.0
          %658 = vmatprep.subr.mxu0 0.0
          %659 = vmatpush1.msra.mxu0 0.0
          %660 = vmatprep.subr.mxu0 0.0
          %661 = vmatpush1.msra.mxu0 0.0
          %662 = vmatprep.subr.mxu0 0.0
          %663 = vmatpush1.msra.mxu0 0.0
          %664 = vmatprep.subr.mxu0 0.0
          %665 = vmatpush1.msra.mxu0 0.0
          %666 = vmatprep.subr.mxu0 0.0
          %667 = vmatpush1.msra.mxu0 0.0
          %668 = vmatprep.subr.mxu0 0.0
          %669 = vmatpush1.msra.mxu0 0.0
          %670 = vmatprep.subr.mxu0 0.0
          %671 = vmatpush1.msra.mxu0 0.0
          %672 = vmatprep.subr.mxu0 0.0
          %673 = vmatpush1.msra.mxu0 0.0
          %674 = vmatprep.subr.mxu0 0.0
          %675 = vmatpush1.msra.mxu0 0.0
          %676 = vmatprep.subr.mxu0 0.0
          %677 = vmatpush1.msra.mxu0 0.0
          %678 = vmatprep.subr.mxu0 0.0
          %679 = vmatpush1.msra.mxu0 0.0
          %680 = vmatprep.subr.mxu0 0.0
          %681 = vmatpush1.msra.mxu0 0.0
          %682 = vmatprep.mubr.f32.mxu0 0.0
          %683 = vmatmul.mubr.f32.gmra.mrb[0].mxu0 %v607
          %v684 = vpop.f32.mrb[0].mxu0
          %v685 = vadd.f32 0.0, %v684
          %v686 = vpop.f32.mrb[0].mxu0
          %687 = vmatprep.mubr.f32.mxu0 0.0
          %688 = vmatmul.mubr.f32.gmra.mrb[0].mxu0 %v610
          %v689 = vpop.f32.mrb[0].mxu0
          %v690 = vadd.f32 0.0, %v689
          %v691 = vpop.f32.mrb[0].mxu0
          %692 = vmatprep.mubr.f32.mxu0 0.0
          %693 = vmatmul.mubr.f32.gmra.mrb[0].mxu0 %v613
          %v694 = vpop.f32.mrb[0].mxu0
          %v695 = vadd.f32 0.0, %v694
          %v696 = vpop.f32.mrb[0].mxu0
          %697 = vmatprep.mubr.f32.mxu0 0.0
          %698 = vmatmul.mubr.f32.gmra.mrb[0].mxu0 %v616
          %v699 = vpop.f32.mrb[0].mxu0
          %v700 = vadd.f32 0.0, %v699
          %v701 = vpop.f32.mrb[0].mxu0
          %702 = vdwg.mxu0
          %703 = vst.msk [vmem:[#allocation3] sm:$0xff] %vm595, %v685
          %704 = vst.msk [vmem:[#allocation3 + $0x8] sm:$0xff] %vm595, %v690
          %705 = vst.msk [vmem:[#allocation3 + $0x10] sm:$0xff] %vm595, %v695
          %706 = vst.msk [vmem:[#allocation3 + $0x18] sm:$0xff] %vm595, %v700
          %v707 = vld [vmem:[%s10] sm:$0xff]
          %v708 = vld [vmem:[%s10 + $0x8] sm:$0xff]
          %v709 = vld [vmem:[%s10 + $0x10] sm:$0xff]
          %v710 = vld [vmem:[%s10 + $0x18] sm:$0xff]
          %v711 = vld [vmem:[%s5] sm:$0xff]
          %vm712 = vcmask 64512
          %v714 = vsel %vm712, %v707, 0
          %v717 = vsel %vm712, %v708, 0
          %v720 = vsel %vm712, %v709, 0
          %v723 = vsel %vm712, %v710, 0
          %725 = vmatprep.subr.mxu0 0.0
          %726 = vmatpush1.msra.mxu0 %v711
          %727 = vmatprep.subr.mxu0 0.0
          %728 = vmatpush1.msra.mxu0 0.0
          %729 = vmatprep.subr.mxu0 0.0
          %730 = vmatpush1.msra.mxu0 0.0
          %731 = vmatprep.subr.mxu0 0.0
          %732 = vmatpush1.msra.mxu0 0.0
          %733 = vmatprep.subr.mxu0 0.0
          %734 = vmatpush1.msra.mxu0 0.0
          %735 = vmatprep.subr.mxu0 0.0
          %736 = vmatpush1.msra.mxu0 0.0
          %737 = vmatprep.subr.mxu0 0.0
          %738 = vmatpush1.msra.mxu0 0.0
          %739 = vmatprep.subr.mxu0 0.0
          %740 = vmatpush1.msra.mxu0 0.0
          %741 = vmatprep.subr.mxu0 0.0
          %742 = vmatpush1.msra.mxu0 0.0
          %743 = vmatprep.subr.mxu0 0.0
          %744 = vmatpush1.msra.mxu0 0.0
          %745 = vmatprep.subr.mxu0 0.0
          %746 = vmatpush1.msra.mxu0 0.0
          %747 = vmatprep.subr.mxu0 0.0
          %748 = vmatpush1.msra.mxu0 0.0
          %749 = vmatprep.subr.mxu0 0.0
          %750 = vmatpush1.msra.mxu0 0.0
          %751 = vmatprep.subr.mxu0 0.0
          %752 = vmatpush1.msra.mxu0 0.0
          %753 = vmatprep.subr.mxu0 0.0
          %754 = vmatpush1.msra.mxu0 0.0
          %755 = vmatprep.subr.mxu0 0.0
          %756 = vmatpush1.msra.mxu0 0.0
          %757 = vmatprep.subr.mxu0 0.0
          %758 = vmatpush1.msra.mxu0 0.0
          %759 = vmatprep.subr.mxu0 0.0
          %760 = vmatpush1.msra.mxu0 0.0
          %761 = vmatprep.subr.mxu0 0.0
          %762 = vmatpush1.msra.mxu0 0.0
          %763 = vmatprep.subr.mxu0 0.0
          %764 = vmatpush1.msra.mxu0 0.0
          %765 = vmatprep.subr.mxu0 0.0
          %766 = vmatpush1.msra.mxu0 0.0
          %767 = vmatprep.subr.mxu0 0.0
          %768 = vmatpush1.msra.mxu0 0.0
          %769 = vmatprep.subr.mxu0 0.0
          %770 = vmatpush1.msra.mxu0 0.0
          %771 = vmatprep.subr.mxu0 0.0
          %772 = vmatpush1.msra.mxu0 0.0
          %773 = vmatprep.subr.mxu0 0.0
          %774 = vmatpush1.msra.mxu0 0.0
          %775 = vmatprep.subr.mxu0 0.0
          %776 = vmatpush1.msra.mxu0 0.0
          %777 = vmatprep.subr.mxu0 0.0
          %778 = vmatpush1.msra.mxu0 0.0
          %779 = vmatprep.subr.mxu0 0.0
          %780 = vmatpush1.msra.mxu0 0.0
          %781 = vmatprep.subr.mxu0 0.0
          %782 = vmatpush1.msra.mxu0 0.0
          %783 = vmatprep.subr.mxu0 0.0
          %784 = vmatpush1.msra.mxu0 0.0
          %785 = vmatprep.subr.mxu0 0.0
          %786 = vmatpush1.msra.mxu0 0.0
          %787 = vmatprep.subr.mxu0 0.0
          %788 = vmatpush1.msra.mxu0 0.0
          %789 = vmatprep.mubr.f32.mxu0 0.0
          %790 = vmatmul.mubr.f32.gmra.mrb[0].mxu0 %v714
          %v791 = vpop.f32.mrb[0].mxu0
          %v792 = vadd.f32 0.0, %v791
          %v793 = vpop.f32.mrb[0].mxu0
          %794 = vmatprep.mubr.f32.mxu0 0.0
          %795 = vmatmul.mubr.f32.gmra.mrb[0].mxu0 %v717
          %v796 = vpop.f32.mrb[0].mxu0
          %v797 = vadd.f32 0.0, %v796
          %v798 = vpop.f32.mrb[0].mxu0
          %799 = vmatprep.mubr.f32.mxu0 0.0
          %800 = vmatmul.mubr.f32.gmra.mrb[0].mxu0 %v720
          %v801 = vpop.f32.mrb[0].mxu0
          %v802 = vadd.f32 0.0, %v801
          %v803 = vpop.f32.mrb[0].mxu0
          %804 = vmatprep.mubr.f32.mxu0 0.0
          %805 = vmatmul.mubr.f32.gmra.mrb[0].mxu0 %v723
          %v806 = vpop.f32.mrb[0].mxu0
          %v807 = vadd.f32 0.0, %v806
          %v808 = vpop.f32.mrb[0].mxu0
          %809 = vdwg.mxu0
          %vm810 = vcmask 31744
          %811 = vst.msk [vmem:[#allocation4] sm:$0xff] %vm810, %v792
          %812 = vst.msk [vmem:[#allocation4 + $0x8] sm:$0xff] %vm810, %v797
          %813 = vst.msk [vmem:[#allocation4 + $0x10] sm:$0xff] %vm810, %v802
          %814 = vst.msk [vmem:[#allocation4 + $0x18] sm:$0xff] %vm810, %v807
          %vm815 = vcmask 0
          %816 = vst.msk [vmem:[#allocation5] sm:$0x1] %vm815, 0.0
          %817 = vst.msk [vmem:[#allocation6] sm:$0x1] %vm815, 0.0
        $region76: #{model_forward.1} parent=71 // pred_fallthru
          _
        %v818 = vld [vmem:[%s482] sm:$0x3f]
        %v819 = vcvt.s32.f32 %v818
        %v820 = vld [vmem:[%s486] sm:$0xf]
        %v821 = vlaneseq
        %v822 = vshrl.u32 %v821, 7
        %v823 = vadd.s32 %v822, 8
        %v824 = vadd.s32 %v822, 16
        %v825 = vadd.s32 %v822, 24
        %v826 = vadd.s32 %v822, 32
        %v827 = vlaneseq
        %v828 = vshrl.u32 %v827, 7
        %v829 = vsub.s32 0, %v828
        %v830 = vrot.slane %v818, %v829
        %vm831 = vcmp.eq.s32.totalorder %v822, %v830
        %vm832 = vcmp.eq.s32.totalorder %v823, %v830
        %vm833 = vcmp.eq.s32.totalorder %v824, %v830
        %vm834 = vcmp.eq.s32.totalorder %v825, %v830
        %vm835 = vcmp.eq.s32.totalorder %v826, %v830
        %v836 = vsel %vm831, 1, 0
        %v837 = vsel %vm832, 1, 0
        %v838 = vsel %vm833, 1, 0
        %v839 = vsel %vm834, 1, 0
        %v840 = vsel %vm835, 1, 0
        %v841 = vcvt.s32.f32 %v836
        %v842 = vcvt.s32.f32 %v837
        %v843 = vcvt.s32.f32 %v838
        %v844 = vcvt.s32.f32 %v839
        %v845 = vcvt.s32.f32 %v840
        %v846 = vlaneseq
        %v847 = vshrl.u32 %v846, 7
        %v848 = vsub.s32 1, %v847
        %v849 = vrot.slane %v818, %v848
        %vm850 = vcmp.eq.s32.totalorder %v822, %v849
        %vm851 = vcmp.eq.s32.totalorder %v823, %v849
        %vm852 = vcmp.eq.s32.totalorder %v824, %v849
        %vm853 = vcmp.eq.s32.totalorder %v825, %v849
        %vm854 = vcmp.eq.s32.totalorder %v826, %v849
        %v855 = vsel %vm850, 1, 0
        %v856 = vsel %vm851, 1, 0
        %v857 = vsel %vm852, 1, 0
        %v858 = vsel %vm853, 1, 0
        %v859 = vsel %vm854, 1, 0
        %v860 = vcvt.s32.f32 %v855
        %v861 = vcvt.s32.f32 %v856
        %v862 = vcvt.s32.f32 %v857
        %v863 = vcvt.s32.f32 %v858
        %v864 = vcvt.s32.f32 %v859
        %v865 = vld [vmem:[#allocation2] sm:$0xff]
        %v866 = vld [vmem:[#allocation2 + $0x8] sm:$0xff]
        %v867 = vld [vmem:[#allocation2 + $0x10] sm:$0xff]
        %v868 = vld [vmem:[#allocation2 + $0x18] sm:$0xff]
        %v869 = vld [vmem:[#allocation3] sm:$0xff]
        %v870 = vld [vmem:[#allocation3 + $0x8] sm:$0xff]
        %v871 = vld [vmem:[#allocation3 + $0x10] sm:$0xff]
        %v872 = vld [vmem:[#allocation3 + $0x18] sm:$0xff]
        %vm873 = vcmask 326656
        %v875 = vsel %vm873, %v869, 0
        %v878 = vsel %vm873, %v870, 0
        %v881 = vsel %vm873, %v871, 0
        %v884 = vsel %vm873, %v872, 0
        %886 = vmatprep.subr.mxu0 0.0
        %887 = vmatpush1.msra.mxu0 %v860
        %888 = vmatprep.subr.mxu0 0.0
        %889 = vmatpush1.msra.mxu0 %v861
        %890 = vmatprep.subr.mxu0 0.0
        %891 = vmatpush1.msra.mxu0 %v862
        %892 = vmatprep.subr.mxu0 0.0
        %893 = vmatpush1.msra.mxu0 %v863
        %894 = vmatprep.subr.mxu0 0.0
        %895 = vmatpush1.msra.mxu0 %v864
        %896 = vmatprep.subr.mxu0 0.0
        %897 = vmatpush1.msra.mxu0 0.0
        %898 = vmatprep.subr.mxu0 0.0
        %899 = vmatpush1.msra.mxu0 0.0
        %900 = vmatprep.subr.mxu0 0.0
        %901 = vmatpush1.msra.mxu0 0.0
        %902 = vmatprep.subr.mxu0 0.0
        %903 = vmatpush1.msra.mxu0 0.0
        %904 = vmatprep.subr.mxu0 0.0
        %905 = vmatpush1.msra.mxu0 0.0
        %906 = vmatprep.subr.mxu0 0.0
        %907 = vmatpush1.msra.mxu0 0.0
        %908 = vmatprep.subr.mxu0 0.0
        %909 = vmatpush1.msra.mxu0 0.0
        %910 = vmatprep.subr.mxu0 0.0
        %911 = vmatpush1.msra.mxu0 0.0
        %912 = vmatprep.subr.mxu0 0.0
        %913 = vmatpush1.msra.mxu0 0.0
        %914 = vmatprep.subr.mxu0 0.0
        %915 = vmatpush1.msra.mxu0 0.0
        %916 = vmatprep.subr.mxu0 0.0
        %917 = vmatpush1.msra.mxu0 0.0
        %918 = vmatprep.subr.mxu0 0.0
        %919 = vmatpush1.msra.mxu0 0.0
        %920 = vmatprep.subr.mxu0 0.0
        %921 = vmatpush1.msra.mxu0 0.0
        %922 = vmatprep.subr.mxu0 0.0
        %923 = vmatpush1.msra.mxu0 0.0
        %924 = vmatprep.subr.mxu0 0.0
        %925 = vmatpush1.msra.mxu0 0.0
        %926 = vmatprep.subr.mxu0 0.0
        %927 = vmatpush1.msra.mxu0 0.0
        %928 = vmatprep.subr.mxu0 0.0
        %929 = vmatpush1.msra.mxu0 0.0
        %930 = vmatprep.subr.mxu0 0.0
        %931 = vmatpush1.msra.mxu0 0.0
        %932 = vmatprep.subr.mxu0 0.0
        %933 = vmatpush1.msra.mxu0 0.0
        %934 = vmatprep.subr.mxu0 0.0
        %935 = vmatpush1.msra.mxu0 0.0
        %936 = vmatprep.subr.mxu0 0.0
        %937 = vmatpush1.msra.mxu0 0.0
        %938 = vmatprep.subr.mxu0 0.0
        %939 = vmatpush1.msra.mxu0 0.0
        %940 = vmatprep.subr.mxu0 0.0
        %941 = vmatpush1.msra.mxu0 0.0
        %942 = vmatprep.subr.mxu0 0.0
        %943 = vmatpush1.msra.mxu0 0.0
        %944 = vmatprep.subr.mxu0 0.0
        %945 = vmatpush1.msra.mxu0 0.0
        %946 = vmatprep.subr.mxu0 0.0
        %947 = vmatpush1.msra.mxu0 0.0
        %948 = vmatprep.subr.mxu0 0.0
        %949 = vmatpush1.msra.mxu0 0.0
        %950 = vmatprep.mubr.f32.mxu0 0.0
        %951 = vmatmul.mubr.f32.gmra.mrb[0].mxu0 %v875
        %v952 = vpop.f32.mrb[0].mxu0
        %v953 = vadd.f32 0.0, %v952
        %v954 = vpop.f32.mrb[0].mxu0
        %955 = vmatprep.mubr.f32.mxu0 0.0
        %956 = vmatmul.mubr.f32.gmra.mrb[0].mxu0 %v878
        %v957 = vpop.f32.mrb[0].mxu0
        %v958 = vadd.f32 0.0, %v957
        %v959 = vpop.f32.mrb[0].mxu0
        %960 = vmatprep.mubr.f32.mxu0 0.0
        %961 = vmatmul.mubr.f32.gmra.mrb[0].mxu0 %v881
        %v962 = vpop.f32.mrb[0].mxu0
        %v963 = vadd.f32 0.0, %v962
        %v964 = vpop.f32.mrb[0].mxu0
        %965 = vmatprep.mubr.f32.mxu0 0.0
        %966 = vmatmul.mubr.f32.gmra.mrb[0].mxu0 %v884
        %v967 = vpop.f32.mrb[0].mxu0
        %v968 = vadd.f32 0.0, %v967
        %v969 = vpop.f32.mrb[0].mxu0
        %970 = vdwg.mxu0
        %v972 = vsel %vm873, %v865, 0
        %v975 = vsel %vm873, %v866, 0
        %v978 = vsel %vm873, %v867, 0
        %v981 = vsel %vm873, %v868, 0
        %983 = vmatprep.subr.mxu0 0.0
        %984 = vmatpush1.msra.mxu0 %v841
        %985 = vmatprep.subr.mxu0 0.0
        %986 = vmatpush1.msra.mxu0 %v842
        %987 = vmatprep.subr.mxu0 0.0
        %988 = vmatpush1.msra.mxu0 %v843
        %989 = vmatprep.subr.mxu0 0.0
        %990 = vmatpush1.msra.mxu0 %v844
        %991 = vmatprep.subr.mxu0 0.0
        %992 = vmatpush1.msra.mxu0 %v845
        %993 = vmatprep.subr.mxu0 0.0
        %994 = vmatpush1.msra.mxu0 0.0
        %995 = vmatprep.subr.mxu0 0.0
        %996 = vmatpush1.msra.mxu0 0.0
        %997 = vmatprep.subr.mxu0 0.0
        %998 = vmatpush1.msra.mxu0 0.0
        %999 = vmatprep.subr.mxu0 0.0
        %1000 = vmatpush1.msra.mxu0 0.0
        %1001 = vmatprep.subr.mxu0 0.0
        %1002 = vmatpush1.msra.mxu0 0.0
        %1003 = vmatprep.subr.mxu0 0.0
        %1004 = vmatpush1.msra.mxu0 0.0
        %1005 = vmatprep.subr.mxu0 0.0
        %1006 = vmatpush1.msra.mxu0 0.0
        %1007 = vmatprep.subr.mxu0 0.0
        %1008 = vmatpush1.msra.mxu0 0.0
        %1009 = vmatprep.subr.mxu0 0.0
        %1010 = vmatpush1.msra.mxu0 0.0
        %1011 = vmatprep.subr.mxu0 0.0
        %1012 = vmatpush1.msra.mxu0 0.0
        %1013 = vmatprep.subr.mxu0 0.0
        %1014 = vmatpush1.msra.mxu0 0.0
        %1015 = vmatprep.subr.mxu0 0.0
        %1016 = vmatpush1.msra.mxu0 0.0
        %1017 = vmatprep.subr.mxu0 0.0
        %1018 = vmatpush1.msra.mxu0 0.0
        %1019 = vmatprep.subr.mxu0 0.0
        %1020 = vmatpush1.msra.mxu0 0.0
        %1021 = vmatprep.subr.mxu0 0.0
        %1022 = vmatpush1.msra.mxu0 0.0
        %1023 = vmatprep.subr.mxu0 0.0
        %1024 = vmatpush1.msra.mxu0 0.0
        %1025 = vmatprep.subr.mxu0 0.0
        %1026 = vmatpush1.msra.mxu0 0.0
        %1027 = vmatprep.subr.mxu0 0.0
        %1028 = vmatpush1.msra.mxu0 0.0
        %1029 = vmatprep.subr.mxu0 0.0
        %1030 = vmatpush1.msra.mxu0 0.0
        %1031 = vmatprep.subr.mxu0 0.0
        %1032 = vmatpush1.msra.mxu0 0.0
        %1033 = vmatprep.subr.mxu0 0.0
        %1034 = vmatpush1.msra.mxu0 0.0
        %1035 = vmatprep.subr.mxu0 0.0
        %1036 = vmatpush1.msra.mxu0 0.0
        %1037 = vmatprep.subr.mxu0 0.0
        %1038 = vmatpush1.msra.mxu0 0.0
        %1039 = vmatprep.subr.mxu0 0.0
        %1040 = vmatpush1.msra.mxu0 0.0
        %1041 = vmatprep.subr.mxu0 0.0
        %1042 = vmatpush1.msra.mxu0 0.0
        %1043 = vmatprep.subr.mxu0 0.0
        %1044 = vmatpush1.msra.mxu0 0.0
        %1045 = vmatprep.subr.mxu0 0.0
        %1046 = vmatpush1.msra.mxu0 0.0
        %1047 = vmatprep.mubr.f32.mxu0 0.0
        %1048 = vmatmul.mubr.f32.gmra.mrb[0].mxu0 %v972
        %v1049 = vpop.f32.mrb[0].mxu0
        %v1050 = vadd.f32 %v953, %v1049
        %v1051 = vpop.f32.mrb[0].mxu0
        %1052 = vmatprep.mubr.f32.mxu0 0.0
        %1053 = vmatmul.mubr.f32.gmra.mrb[0].mxu0 %v975
        %v1054 = vpop.f32.mrb[0].mxu0
        %v1055 = vadd.f32 %v958, %v1054
        %v1056 = vpop.f32.mrb[0].mxu0
        %1057 = vmatprep.mubr.f32.mxu0 0.0
        %1058 = vmatmul.mubr.f32.gmra.mrb[0].mxu0 %v978
        %v1059 = vpop.f32.mrb[0].mxu0
        %v1060 = vadd.f32 %v963, %v1059
        %v1061 = vpop.f32.mrb[0].mxu0
        %1062 = vmatprep.mubr.f32.mxu0 0.0
        %1063 = vmatmul.mubr.f32.gmra.mrb[0].mxu0 %v981
        %v1064 = vpop.f32.mrb[0].mxu0
        %v1065 = vadd.f32 %v968, %v1064
        %v1066 = vpop.f32.mrb[0].mxu0
        %1067 = vdwg.mxu0
        %v1068 = vld [vmem:[%s8] sm:$0xff]
        %v1069 = vld [vmem:[%s8 + $0x8] sm:$0xff]
        %v1070 = vld [vmem:[%s8 + $0x10] sm:$0xff]
        %v1071 = vld [vmem:[%s8 + $0x18] sm:$0xff]
        %v1073 = vrot.slane %v819, 2
        %vm1074 = vcmask 31744
        %v1076 = vsel %vm1074, %v1068, 0
        %v1079 = vsel %vm1074, %v1069, 0
        %v1082 = vsel %vm1074, %v1070, 0
        %v1085 = vsel %vm1074, %v1071, 0
        %vm1087 = vcmask 1043456
        %v1088 = vsel %vm1087, %v1073, 0
        %1090 = vmatprep.subr.mxu0 0.0
        %1091 = vmatpush1.msra.mxu0 %v1088
        %1092 = vmatprep.subr.mxu0 0.0
        %1093 = vmatpush1.msra.mxu0 0.0
        %1094 = vmatprep.subr.mxu0 0.0
        %1095 = vmatpush1.msra.mxu0 0.0
        %1096 = vmatprep.subr.mxu0 0.0
        %1097 = vmatpush1.msra.mxu0 0.0
        %1098 = vmatprep.subr.mxu0 0.0
        %1099 = vmatpush1.msra.mxu0 0.0
        %1100 = vmatprep.subr.mxu0 0.0
        %1101 = vmatpush1.msra.mxu0 0.0
        %1102 = vmatprep.subr.mxu0 0.0
        %1103 = vmatpush1.msra.mxu0 0.0
        %1104 = vmatprep.subr.mxu0 0.0
        %1105 = vmatpush1.msra.mxu0 0.0
        %1106 = vmatprep.subr.mxu0 0.0
        %1107 = vmatpush1.msra.mxu0 0.0
        %1108 = vmatprep.subr.mxu0 0.0
        %1109 = vmatpush1.msra.mxu0 0.0
        %1110 = vmatprep.subr.mxu0 0.0
        %1111 = vmatpush1.msra.mxu0 0.0
        %1112 = vmatprep.subr.mxu0 0.0
        %1113 = vmatpush1.msra.mxu0 0.0
        %1114 = vmatprep.subr.mxu0 0.0
        %1115 = vmatpush1.msra.mxu0 0.0
        %1116 = vmatprep.subr.mxu0 0.0
        %1117 = vmatpush1.msra.mxu0 0.0
        %1118 = vmatprep.subr.mxu0 0.0
        %1119 = vmatpush1.msra.mxu0 0.0
        %1120 = vmatprep.subr.mxu0 0.0
        %1121 = vmatpush1.msra.mxu0 0.0
        %1122 = vmatprep.subr.mxu0 0.0
        %1123 = vmatpush1.msra.mxu0 0.0
        %1124 = vmatprep.subr.mxu0 0.0
        %1125 = vmatpush1.msra.mxu0 0.0
        %1126 = vmatprep.subr.mxu0 0.0
        %1127 = vmatpush1.msra.mxu0 0.0
        %1128 = vmatprep.subr.mxu0 0.0
        %1129 = vmatpush1.msra.mxu0 0.0
        %1130 = vmatprep.subr.mxu0 0.0
        %1131 = vmatpush1.msra.mxu0 0.0
        %1132 = vmatprep.subr.mxu0 0.0
        %1133 = vmatpush1.msra.mxu0 0.0
        %1134 = vmatprep.subr.mxu0 0.0
        %1135 = vmatpush1.msra.mxu0 0.0
        %1136 = vmatprep.subr.mxu0 0.0
        %1137 = vmatpush1.msra.mxu0 0.0
        %1138 = vmatprep.subr.mxu0 0.0
        %1139 = vmatpush1.msra.mxu0 0.0
        %1140 = vmatprep.subr.mxu0 0.0
        %1141 = vmatpush1.msra.mxu0 0.0
        %1142 = vmatprep.subr.mxu0 0.0
        %1143 = vmatpush1.msra.mxu0 0.0
        %1144 = vmatprep.subr.mxu0 0.0
        %1145 = vmatpush1.msra.mxu0 0.0
        %1146 = vmatprep.subr.mxu0 0.0
        %1147 = vmatpush1.msra.mxu0 0.0
        %1148 = vmatprep.subr.mxu0 0.0
        %1149 = vmatpush1.msra.mxu0 0.0
        %1150 = vmatprep.subr.mxu0 0.0
        %1151 = vmatpush1.msra.mxu0 0.0
        %1152 = vmatprep.subr.mxu0 0.0
        %1153 = vmatpush1.msra.mxu0 0.0
        %1154 = vmatprep.mubr.f32.mxu0 0.0
        %1155 = vmatmul.mubr.f32.gmra.mrb[0].mxu0 %v1076
        %v1156 = vpop.f32.mrb[0].mxu0
        %v1157 = vadd.f32 0.0, %v1156
        %v1158 = vpop.f32.mrb[0].mxu0
        %1159 = vmatprep.mubr.f32.mxu0 0.0
        %1160 = vmatmul.mubr.f32.gmra.mrb[0].mxu0 %v1079
        %v1161 = vpop.f32.mrb[0].mxu0
        %v1162 = vadd.f32 0.0, %v1161
        %v1163 = vpop.f32.mrb[0].mxu0
        %1164 = vmatprep.mubr.f32.mxu0 0.0
        %1165 = vmatmul.mubr.f32.gmra.mrb[0].mxu0 %v1082
        %v1166 = vpop.f32.mrb[0].mxu0
        %v1167 = vadd.f32 0.0, %v1166
        %v1168 = vpop.f32.mrb[0].mxu0
        %1169 = vmatprep.mubr.f32.mxu0 0.0
        %1170 = vmatmul.mubr.f32.gmra.mrb[0].mxu0 %v1085
        %v1171 = vpop.f32.mrb[0].mxu0
        %v1172 = vadd.f32 0.0, %v1171
        %v1173 = vpop.f32.mrb[0].mxu0
        %1174 = vdwg.mxu0
        %v1175 = vadd.f32 %v1050, %v1157
        %v1176 = vadd.f32 %v1055, %v1162
        %v1177 = vadd.f32 %v1060, %v1167
        %v1178 = vadd.f32 %v1065, %v1172
        %v1179 = vld [vmem:[%s9] sm:$0xff]
        %v1180 = vld [vmem:[%s9 + $0x8] sm:$0xff]
        %v1181 = vld [vmem:[%s9 + $0x10] sm:$0xff]
        %v1182 = vld [vmem:[%s9 + $0x18] sm:$0xff]
        %1184 = vset.pattern.permute.xlu0 0
        %1185 = vperm.xlu0 %1184, %v1179
        %v1186 = vpop.permute.xlu0 %1185
        %1189 = vset.pattern.permute.xlu0 0
        %1190 = vperm.xlu0 %1189, %v1180
        %v1191 = vpop.permute.xlu0 %1190
        %1194 = vset.pattern.permute.xlu0 0
        %1195 = vperm.xlu0 %1194, %v1181
        %v1196 = vpop.permute.xlu0 %1195
        %1199 = vset.pattern.permute.xlu0 0
        %1200 = vperm.xlu0 %1199, %v1182
        %v1201 = vpop.permute.xlu0 %1200
        %v1203 = vlaneseq
        %v1204 = vshrl.u32 %v1203, 7
        %v1205 = vsub.s32 1, %v1204
        %v1206 = vrot.slane %v820, %v1205
        %v1207 = vmul.f32 %v1186, %v1206
        %v1208 = vmul.f32 %v1191, %v1206
        %v1209 = vmul.f32 %v1196, %v1206
        %v1210 = vmul.f32 %v1201, %v1206
        %v1211 = vadd.f32 %v1175, %v1207
        %v1212 = vadd.f32 %v1176, %v1208
        %v1213 = vadd.f32 %v1177, %v1209
        %v1214 = vadd.f32 %v1178, %v1210
        %s1215 = sld [smem:[#allocation8 + %s39]]
        %v1216 = vlaneseq
        %v1217 = vand.u32 %v1216, 127
        %v1218 = vstv %s1215
        %vm1219 = vcmp.eq.s32.totalorder %v1217, %v1218
        %v1220 = vsel %vm1219, 1, 0
        %v1221 = vcvt.s32.f32 %v1220
        %v1222 = vld [vmem:[#allocation4] sm:$0xff]
        %v1223 = vld [vmem:[#allocation4 + $0x8] sm:$0xff]
        %v1224 = vld [vmem:[#allocation4 + $0x10] sm:$0xff]
        %v1225 = vld [vmem:[#allocation4 + $0x18] sm:$0xff]
        %v1226 = vmul.f32 %v1222, %v1221
        %v1227 = vmul.f32 %v1223, %v1221
        %v1228 = vmul.f32 %v1224, %v1221
        %v1229 = vmul.f32 %v1225, %v1221
        %v1230 = vsel %vm1074, %v1226, 0.0
        %1231 = vadd.xlane.f32.xlu0 %v1230
        %v1232 = vpop.xlane.xlu0 %1231
        %v1233 = vsel %vm1074, %v1227, 0.0
        %1234 = vadd.xlane.f32.xlu0 %v1233
        %v1235 = vpop.xlane.xlu0 %1234
        %v1236 = vsel %vm1074, %v1228, 0.0
        %1237 = vadd.xlane.f32.xlu0 %v1236
        %v1238 = vpop.xlane.xlu0 %1237
        %v1239 = vsel %vm1074, %v1229, 0.0
        %1240 = vadd.xlane.f32.xlu0 %v1239
        %v1241 = vpop.xlane.xlu0 %1240
        %v1242 = vadd.f32 %v1211, %v1232
        %v1243 = vadd.f32 %v1212, %v1235
        %v1244 = vadd.f32 %v1213, %v1238
        %v1245 = vadd.f32 %v1214, %v1241
        %v1246 = vld [vmem:[%s11] sm:$0xff]
        %v1247 = vld [vmem:[%s11 + $0x8] sm:$0xff]
        %v1248 = vld [vmem:[%s11 + $0x10] sm:$0xff]
        %v1249 = vld [vmem:[%s11 + $0x18] sm:$0xff]
        %1251 = vset.pattern.permute.xlu0 0
        %1252 = vperm.xlu0 %1251, %v1246
        %v1253 = vpop.permute.xlu0 %1252
        %1256 = vset.pattern.permute.xlu0 0
        %1257 = vperm.xlu0 %1256, %v1247
        %v1258 = vpop.permute.xlu0 %1257
        %1261 = vset.pattern.permute.xlu0 0
        %1262 = vperm.xlu0 %1261, %v1248
        %v1263 = vpop.permute.xlu0 %1262
        %1266 = vset.pattern.permute.xlu0 0
        %1267 = vperm.xlu0 %1266, %v1249
        %v1268 = vpop.permute.xlu0 %1267
        %v1270 = vadd.f32 %v1242, %v1253
        %v1271 = vadd.f32 %v1243, %v1258
        %v1272 = vadd.f32 %v1244, %v1263
        %v1273 = vadd.f32 %v1245, %v1268
        %v1274 = vmax.f32 %v1270, 0.0
        %v1275 = vmax.f32 %v1271, 0.0
        %v1276 = vmax.f32 %v1272, 0.0
        %v1277 = vmax.f32 %v1273, 0.0
        %v1278 = vld [vmem:[%s12] sm:$0xff]
        %v1279 = vld [vmem:[%s12 + $0x8] sm:$0xff]
        %v1280 = vld [vmem:[%s12 + $0x10] sm:$0xff]
        %v1281 = vld [vmem:[%s12 + $0x18] sm:$0xff]
        %1283 = vset.pattern.permute.xlu0 0
        %1284 = vperm.xlu0 %1283, %v1278
        %v1285 = vpop.permute.xlu0 %1284
        %1288 = vset.pattern.permute.xlu0 0
        %1289 = vperm.xlu0 %1288, %v1279
        %v1290 = vpop.permute.xlu0 %1289
        %1293 = vset.pattern.permute.xlu0 0
        %1294 = vperm.xlu0 %1293, %v1280
        %v1295 = vpop.permute.xlu0 %1294
        %1298 = vset.pattern.permute.xlu0 0
        %1299 = vperm.xlu0 %1298, %v1281
        %v1300 = vpop.permute.xlu0 %1299
        %v1302 = vmul.f32 %v1285, %v1274
        %v1303 = vmul.f32 %v1290, %v1275
        %v1304 = vmul.f32 %v1295, %v1276
        %v1305 = vmul.f32 %v1300, %v1277
        %vm1306 = vcmask 64512
        %v1307 = vsel %vm1306, %v1302, 0.0
        %v1308 = vsel %vm1306, %v1303, 0.0
        %v1309 = vadd.f32 %v1307, %v1308
        %v1310 = vsel %vm1306, %v1304, 0.0
        %v1311 = vadd.f32 %v1309, %v1310
        %v1312 = vsel %vm1306, %v1305, 0.0
        %v1313 = vadd.f32 %v1311, %v1312
        %v1314 = vrot.slane %v1313, 4
        %v1315 = vadd.f32 %v1313, %v1314
        %v1316 = vrot.slane %v1315, 2
        %v1317 = vadd.f32 %v1315, %v1316
        %v1318 = vrot.slane %v1317, 1
        %v1319 = vadd.f32 %v1317, %v1318
        %v1320 = vld [vmem:[#allocation9] sm:$0x1]
        %1322 = vset.pattern.permute.xlu0 0
        %1323 = vperm.xlu0 %1322, %v1320
        %v1324 = vpop.permute.xlu0 %1323
        %v1326 = vlaneseq
        %v1327 = vshrl.u32 %v1326, 7
        %v1328 = vsub.s32 0, %v1327
        %v1329 = vrot.slane %v1324, %v1328
        %v1330 = vadd.f32 %v1319, %v1329
        %vm1331 = vcmask 57344
        %1332 = vst.msk [vmem:[%s478] sm:$0x1] %vm1331, %v1330
        %v1333 = vsub.f32 1.0, %v820
        %v1335 = vrot.slane %v1333, 1
        %v1337 = vmul.f32 %v820, %v1335
        %v1338 = vsub.f32 %v1330, %v820
        %v1339 = vand.u32 2147483647, %v1338
        %v1341 = vrot.slane %v1337, 2
        %v1343 = vmul.f32 %v1339, %v1341
        %v1344 = vld [vmem:[#allocation5] sm:$0x1]
        %v1345 = vsel %vm1331, %v1343, 0.0
        %1346 = vadd.xlane.f32.xlu0 %v1345
        %v1347 = vpop.xlane.xlu0 %1346
        %v1348 = vrot.slane %v1347, 4
        %v1349 = vadd.f32 %v1347, %v1348
        %v1350 = vrot.slane %v1349, 2
        %v1351 = vadd.f32 %v1349, %v1350
        %v1352 = vrot.slane %v1351, 1
        %v1353 = vadd.f32 %v1351, %v1352
        %s1354 = vtos %v1353
        %v1355 = vstv %s1354
        %v1356 = vadd.f32 %v1344, %v1355
        %vm1357 = vcmask 0
        %1358 = vst.msk [vmem:[#allocation5] sm:$0x1] %vm1357, %v1356
        %v1359 = vld [vmem:[#allocation6] sm:$0x1]
        %v1360 = vsel %vm1331, %v1341, 0.0
        %1361 = vadd.xlane.f32.xlu0 %v1360
        %v1362 = vpop.xlane.xlu0 %1361
        %v1363 = vrot.slane %v1362, 4
        %v1364 = vadd.f32 %v1362, %v1363
        %v1365 = vrot.slane %v1364, 2
        %v1366 = vadd.f32 %v1364, %v1365
        %v1367 = vrot.slane %v1366, 1
        %v1368 = vadd.f32 %v1366, %v1367
        %s1369 = vtos %v1368
        %v1370 = vstv %s1369
        %v1371 = vadd.f32 %v1359, %v1370
        %1372 = vst.msk [vmem:[#allocation6] sm:$0x1] %vm1357, %v1371
        %p1373 = scmp.eq.s32.totalorder %s39, 1
        // Predicated region
        $region77: #{model_forward.1} parent=71 // pred_check
          %p1374 = pneg %p1373
        $region78: #{model_forward.1} parent=71 // pred_check_branch
          %1376 = sbr.rel (%p1374) target = $region80
        $region79: #{model_forward.1} parent=71 // pred_region
          %v1377 = vld [vmem:[#allocation5] sm:$0x1]
          %v1378 = vld [vmem:[#allocation6] sm:$0x1]
          %v1379 = vrcp.pop %v1378
          %v1380 = vmul.f32 %v1377, %v1379
          %1381 = vst.msk [vmem:[#allocation10] sm:$0x1] %vm1357, %v1380
        $region80: #{model_forward.1} parent=71 // pred_fallthru
          _
        %s1382 = sand.u32 %s351, 1
        %s1383 = scalar_lea.sflag [#allocation13], %s1382
        %s1384 = sand.u32 %s351, 1
        %s1385 = scalar_lea.vmem [#allocation12], %s1384
        // Predicated region
        $region81: #{model_forward.1} parent=71 // pred_check
          %p1386 = pneg %p335
        $region82: #{model_forward.1} parent=71 // pred_check_branch
          %1388 = sbr.rel (%p1386) target = $region84
        $region83: #{model_forward.1} parent=71 // pred_region
          %s1390 = ssub.s32 16, 16
          %1391 = vsyncadd [#allocation11], %s1390
          %s1393 = sshll.u32 [#allocation10], 4
          %s1394 = int_to_ptr.vmem [resolvable:$true] %s1393
          %1396 = dma.vmem_to_hbm [thread:$0]  %s1394, 16, %s14, [#allocation11]
        $region84: #{model_forward.1} parent=71 // pred_fallthru
          _
        // Predicated region
        $region85: #{model_forward.1} parent=71 // pred_check
          %p1397 = pneg %p361
        $region86: #{model_forward.1} parent=71 // pred_check_branch
          %1399 = sbr.rel (%p1397) target = $region88
        $region87: #{model_forward.1} parent=71 // pred_region
          %s1401 = ssub.s32 16, 16
          %1402 = vsyncadd %s1383, %s1401
          %s1403 = smul.addr %s39, 16
          %s1404 = scalar_lea.hbm %s15, %s1403
          %s1406 = sshll.u32 %s1385, 4
          %s1407 = int_to_ptr.vmem [resolvable:$true] %s1406
          %1409 = dma.vmem_to_hbm [thread:$0]  %s1407, 16, %s1404, %s1383
        $region88: #{model_forward.1} parent=71 // pred_fallthru
          _
        // Predicated region
        $region89: #{model_forward.1} parent=71 // pred_check
          %p1410 = pneg %p335
        $region90: #{model_forward.1} parent=71 // pred_check_branch
          %1412 = sbr.rel (%p1410) target = $region92
        $region91: #{model_forward.1} parent=71 // pred_region
          %1413 = dma.done [#allocation11], 16
        $region92: #{model_forward.1} parent=71 // pred_fallthru
          _
      $region72: #{model_forward.1} parent=5 // pred_fallthru
        _
      %p1414 = scmp.le.s32.totalorder 2, %s34
      // Predicated region
      $region93: #{model_forward.1} parent=5 // pred_check
        %p1415 = pneg %p1414
      $region94: #{model_forward.1} parent=5 // pred_check_branch
        %1417 = sbr.rel (%p1415) target = $region96
      $region95: #{model_forward.1} parent=5 // pred_region
        %s1418 = ssub.s32 %s34, 2
        // Predicated region
        $region97: #{model_forward.1} parent=95 // pred_check
          %p1419 = pneg %p367
        $region98: #{model_forward.1} parent=95 // pred_check_branch
          %1421 = sbr.rel (%p1419) target = $region100
        $region99: #{model_forward.1} parent=95 // pred_region
          %s1422 = sand.u32 %s352, 1
          %s1423 = scalar_lea.sflag [#allocation13], %s1422
          %s1424 = sand.u32 %s352, 1
          %s1425 = scalar_lea.vmem [#allocation12], %s1424
          %1426 = dma.done %s1423, 16
        $region100: #{model_forward.1} parent=95 // pred_fallthru
          _
      $region96: #{model_forward.1} parent=5 // pred_fallthru
        _
    $region6: #{model_forward.1} parent=1 // loop_footer
      %s38 = sadd.s32 1, %s34
    $region7: #{model_forward.1} parent=1 // loop_footer_branch
      %33 = sbr.rel target = $region3
    $region8: #{model_forward.1} parent=1 // loop_exit
      _
    %1427 = vsyncpa [#allocation11], 1
    %s1428 = scalar_lea.sflag [#allocation11], 1
    %1429 = vsyncpa %s1428, 1
    %1430 = vsyncpa [#allocation13], 1
    %s1431 = scalar_lea.sflag [#allocation13], 1
    %1432 = vsyncpa %s1431, 1

</llo_original>
